<compile_context>
chip_gen: v7x
topology: tpu7x:2x2x1
jax: 0.10.0
libtpu: 0.0.40
codegen_flags: <defaults>
</compile_context>

<pallas_src>
import jax
import jax.numpy as jnp
import numpy as np
from jax.experimental import pallas as pl
from jax.experimental.pallas import tpu as pltpu

# ---- config (mirrors the cfg fields fakeCNN / MLP actually use) ----
KS = 3                               # cfg.kernel_size
IMG_DIM = 8                          # cfg.img_dim
B = 2                                # batch size
IN_DIM = IMG_DIM * IMG_DIM           # per-channel flattened image (64)
HIDDEN = 32                          # cfg.hidden_dim
NBLOCKS = KS * KS                    # cfg.blocks (9)
BLOCK_OUT = (IMG_DIM - KS + 1) ** 2  # cfg.block_output_dim (36)
MERGE_DIM = 4                        # cfg.merge_dim
ACTIVATION = 1                       # cfg.activation != 0 -> SmoothStep applied
SS_GAMMA = 1.0                       # cfg.ss_gamma

NH = NBLOCKS * HIDDEN                # 288 (all blocks' hidden units, concatenated)
NCOLS = NBLOCKS * BLOCK_OUT          # 324 (all blocks' outputs, concatenated)

# SmoothStep coefficients
SS_LO = -SS_GAMMA / 2.0
SS_HI = SS_GAMMA / 2.0
SS_A3 = -2.0 / SS_GAMMA ** 3
SS_A1 = 3.0 / (2.0 * SS_GAMMA)
SS_A0 = 0.5


def _smoothstep(y):
    return jnp.where(
        y <= SS_LO, jnp.zeros_like(y),
        jnp.where(y >= SS_HI, jnp.ones_like(y),
                  SS_A3 * y * y * y + SS_A1 * y + SS_A0))


def _fused_kernel(x_ref, w1_ref, w2_ref, w3_ref, hrow_ref, jmat_ref, smat_ref, o_ref):
    """Whole fakeCNN forward hot path in one invocation (grid=()).

    x_ref    : (4*B, IN_DIM)      rows ordered (j, b); j = rotation channel
    w1_ref   : (IN_DIM, 9*HIDDEN) concat_n W1[n].T
    w2_ref   : (9*HIDDEN, 9*HIDDEN) block-diag of W2[n].T
    w3_ref   : (9*HIDDEN, 9*BLOCK_OUT) block-diag of W3[n].T
    hrow_ref : (4, 4*B, 9*BLOCK_OUT)  hrow[i, j*B+b, n*36+d] = h[i, j, n]
    jmat_ref : (B, 4*B)           sums rows over j (preserving b)
    smat_ref : (9*BLOCK_OUT, BLOCK_OUT) sums columns over block n (preserving d)
    o_ref    : (4, B, BLOCK_OUT)
    """
    x = x_ref[...]                                                       # (4B, 64)
    y = jnp.dot(x, w1_ref[...], preferred_element_type=jnp.float32)      # (4B, 288)
    y = jnp.maximum(y, 0.0)
    y = jnp.dot(y, w2_ref[...], preferred_element_type=jnp.float32)      # (4B, 288)
    y = jnp.maximum(y, 0.0)
    y = jnp.dot(y, w3_ref[...], preferred_element_type=jnp.float32)      # (4B, 324)
    a = _smoothstep(y) if ACTIVATION != 0 else y                         # (4B, 324)

    jmat = jmat_ref[...]                                                 # (B, 4B)
    smat = smat_ref[...]                                                 # (324, 36)
    for i in range(4):  # static unroll over the 4 output rotation slabs
        # weight by h[i, j, n], sum over j (rows), then over n (columns)
        t = jnp.dot(jmat, hrow_ref[i] * a, preferred_element_type=jnp.float32)   # (B, 324)
        o_ref[i] = jnp.dot(t, smat, preferred_element_type=jnp.float32)          # (B, 36)


def _compute_h(cparams, params):
    """Glue: cp (16 transforms summed) and per-(i, j) block-mixing weights h."""
    c49 = cparams.reshape(4, KS * KS)
    cp = jnp.einsum('tbij,bj->ti', params['T'], c49).reshape(4, 4, KS * KS)
    hh = (cp[..., :, None] * params['mtx1'][None, None, :, :]
          ).reshape(4, 4, KS * KS * MERGE_DIM) @ params['mtx2']
    return hh  # (4, 4, NBLOCKS)


def _block_diag_of_transposes(w):
    """w: (N, out_dim, in_dim) -> block-diag of the w[n].T, shape (N*in, N*out)."""
    n, o, i = w.shape
    wt = jnp.transpose(w, (0, 2, 1))                 # (N, in, out)
    bd = jnp.zeros((n, i, n, o), w.dtype)
    idx = jnp.arange(n)
    bd = bd.at[idx, :, idx, :].set(wt)               # bd[k, :, k, :] = w[k].T
    return bd.reshape(n * i, n * o)


def pallas_forward(img, cparams, params):
    bsz = img.shape[0]
    # (B, 4, H, W) -> (4, B, H*W) -> (4*B, IN_DIM), rows = j*B + b
    x_all = jnp.transpose(img, (1, 0, 2, 3)).reshape(4 * bsz, IN_DIM).astype(jnp.float32)

    # Block-mixing weights h[i, j, n], expanded to per-row / per-column form.
    hh = _compute_h(cparams, params).astype(jnp.float32)                  # (4, 4, 9)
    hexp = jnp.repeat(hh, BLOCK_OUT, axis=2)                              # (4, 4, 324)
    hrow = jnp.repeat(hexp, bsz, axis=1)                                  # (4, 4*B, 324)

    # Pre-transposed / fused weights (pure XLA layout plumbing, done once).
    w1cat = jnp.transpose(params['W1'], (2, 0, 1)).reshape(IN_DIM, NH)    # (64, 288)
    w2bd = _block_diag_of_transposes(params['W2'])                        # (288, 288)
    w3bd = _block_diag_of_transposes(params['W3'])                        # (288, 324)

    # Fixed summation matrices (sum over j on rows, over block n on columns).
    jmat = jnp.tile(jnp.eye(bsz, dtype=jnp.float32), (1, 4))              # (B, 4*B)
    smat = jnp.tile(jnp.eye(BLOCK_OUT, dtype=jnp.float32), (NBLOCKS, 1))  # (324, 36)

    r = 4 * bsz
    flops = 2 * (r * IN_DIM * NH + r * NH * NH + r * NH * NCOLS) \
        + 4 * 2 * (bsz * r * NCOLS + bsz * NCOLS * BLOCK_OUT)
    bytes_accessed = 4 * (r * IN_DIM + IN_DIM * NH + NH * NH + NH * NCOLS
                          + 4 * r * NCOLS + bsz * r + NCOLS * BLOCK_OUT
                          + 4 * bsz * BLOCK_OUT)

    out = pl.pallas_call(
        _fused_kernel,
        out_shape=jax.ShapeDtypeStruct((4, bsz, BLOCK_OUT), jnp.float32),
        in_specs=[pl.BlockSpec(memory_space=pltpu.MemorySpace.VMEM)] * 7,
        out_specs=pl.BlockSpec(memory_space=pltpu.MemorySpace.VMEM),
        cost_estimate=pl.CostEstimate(flops=flops, transcendentals=0,
                                      bytes_accessed=bytes_accessed),
    )(x_all, w1cat, w2bd, w3bd, hrow, jmat, smat)

    # (4, B, D) -> (B, 4, D)   (== torch.stack(mlp_out).transpose(0, 1))
    return jnp.transpose(out, (1, 0, 2))


def reference_forward(img, cparams, params):
    """Pure-JAX reference mirroring the PyTorch forward literally."""
    bsz = img.shape[0]
    X = jnp.transpose(img, (1, 0, 2, 3)).reshape(4, bsz, IN_DIM).astype(jnp.float32)
    hh = _compute_h(cparams, params)
    outs = []
    for i in range(4):
        acc = jnp.zeros((bsz, BLOCK_OUT), jnp.float32)
        for j in range(4):
            x = X[j]
            for blk in range(NBLOCKS):
                y = jnp.maximum(x @ params['W1'][blk].T, 0.0)
                y = jnp.maximum(y @ params['W2'][blk].T, 0.0)
                y = y @ params['W3'][blk].T
                a = _smoothstep(y) if ACTIVATION != 0 else y
                acc = acc + hh[i, j, blk] * a
        outs.append(acc)
    return jnp.transpose(jnp.stack(outs), (1, 0, 2))


def init_params(key):
    """Deterministic synthetic parameters with the shapes implied by __init__."""
    ks = jax.random.split(key, 6)
    lim1 = 1.0 / np.sqrt(IN_DIM)
    lim2 = 1.0 / np.sqrt(HIDDEN)
    return {
        # stacked per-block MLP weights (bias=False Linears): y = x @ W.T
        'W1': jax.random.uniform(ks[0], (NBLOCKS, HIDDEN, IN_DIM), jnp.float32, -lim1, lim1),
        'W2': jax.random.uniform(ks[1], (NBLOCKS, HIDDEN, HIDDEN), jnp.float32, -lim2, lim2),
        'W3': jax.random.uniform(ks[2], (NBLOCKS, BLOCK_OUT, HIDDEN), jnp.float32, -lim2, lim2),
        # MLP.mtx1 / mtx2 (torch.rand -> U[0,1))
        'mtx1': jax.random.uniform(ks[3], (KS * KS, MERGE_DIM), jnp.float32),
        'mtx2': jax.random.uniform(ks[4], (KS * KS * MERGE_DIM, NBLOCKS), jnp.float32),
        # fakeCNN.cparams_transform: 16 x (4, ks^2, ks^2), stacked
        'T': jax.random.uniform(ks[5], (16, 4, KS * KS, KS * KS), jnp.float32),
    }


if __name__ == "__main__":
    key = jax.random.PRNGKey(0)
    kp, ki, kc = jax.random.split(key, 3)
    params = init_params(kp)

    img = jax.random.normal(ki, (B, 4, IMG_DIM, IMG_DIM), jnp.float32)   # NCHW
    cparams = jax.random.normal(kc, (4 * KS * KS,), jnp.float32)

    out = pallas_forward(img, cparams, params)
    out = jax.block_until_ready(out)
    assert out.shape == (B, 4, BLOCK_OUT)

    ref = reference_forward(img, cparams, params)
    np.testing.assert_allclose(np.asarray(out), np.asarray(ref), rtol=2e-3, atol=2e-2)
    print("KERNEL_OK")
</pallas_src>

<mosaic_0001>
module attributes {stable_mosaic.version = 11 : i64} {
  func.func @_fused_kernel(%arg0: memref<8x64xf32, #tpu.memory_space<vmem>>, %arg1: memref<64x288xf32, #tpu.memory_space<vmem>>, %arg2: memref<288x288xf32, #tpu.memory_space<vmem>>, %arg3: memref<288x324xf32, #tpu.memory_space<vmem>>, %arg4: memref<4x8x324xf32, #tpu.memory_space<vmem>>, %arg5: memref<2x8xf32, #tpu.memory_space<vmem>>, %arg6: memref<324x36xf32, #tpu.memory_space<vmem>>, %arg7: memref<4x2x36xf32, #tpu.memory_space<vmem>>) attributes {dimension_semantics = [], scalar_prefetch = 0 : i64, scratch_operands = 0 : i64, tpu.core_type = #tpu.core_type<tc>} {
    %c0 = arith.constant 0 : index
    %c0_0 = arith.constant 0 : index
    %0 = vector.load %arg0[%c0, %c0_0] : memref<8x64xf32, #tpu.memory_space<vmem>>, vector<8x64xf32>
    %c0_1 = arith.constant 0 : index
    %c0_2 = arith.constant 0 : index
    %1 = vector.load %arg1[%c0_1, %c0_2] : memref<64x288xf32, #tpu.memory_space<vmem>>, vector<64x288xf32>
    %cst = arith.constant dense<0.000000e+00> : vector<8x288xf32>
    %2 = tpu.matmul %0, %1, %cst {dimension_numbers = #tpu.dot_dimension_numbers<[1], [0], [0], [1], [0, 0, 1, 1], [], []>} : vector<8x64xf32>, vector<64x288xf32>, vector<8x288xf32> -> vector<8x288xf32>
    %cst_3 = arith.constant 0.000000e+00 : f32
    %3 = vector.broadcast %cst_3 : f32 to vector<8x288xf32>
    %4 = arith.maximumf %2, %3 : vector<8x288xf32>
    %c0_4 = arith.constant 0 : index
    %c0_5 = arith.constant 0 : index
    %5 = vector.load %arg2[%c0_4, %c0_5] : memref<288x288xf32, #tpu.memory_space<vmem>>, vector<288x288xf32>
    %cst_6 = arith.constant dense<0.000000e+00> : vector<8x288xf32>
    %6 = tpu.matmul %4, %5, %cst_6 {dimension_numbers = #tpu.dot_dimension_numbers<[1], [0], [0], [1], [0, 0, 1, 1], [], []>} : vector<8x288xf32>, vector<288x288xf32>, vector<8x288xf32> -> vector<8x288xf32>
    %cst_7 = arith.constant 0.000000e+00 : f32
    %7 = vector.broadcast %cst_7 : f32 to vector<8x288xf32>
    %8 = arith.maximumf %6, %7 : vector<8x288xf32>
    %c0_8 = arith.constant 0 : index
    %c0_9 = arith.constant 0 : index
    %9 = vector.load %arg3[%c0_8, %c0_9] : memref<288x324xf32, #tpu.memory_space<vmem>>, vector<288x324xf32>
    %cst_10 = arith.constant dense<0.000000e+00> : vector<8x324xf32>
    %10 = tpu.matmul %8, %9, %cst_10 {dimension_numbers = #tpu.dot_dimension_numbers<[1], [0], [0], [1], [0, 0, 1, 1], [], []>} : vector<8x288xf32>, vector<288x324xf32>, vector<8x324xf32> -> vector<8x324xf32>
    %cst_11 = arith.constant -5.000000e-01 : f32
    %11 = vector.broadcast %cst_11 : f32 to vector<8x324xf32>
    %12 = arith.cmpf ole, %10, %11 : vector<8x324xf32>
    %cst_12 = arith.constant 0.000000e+00 : f32
    %13 = vector.broadcast %cst_12 : f32 to vector<8x324xf32>
    %cst_13 = arith.constant 5.000000e-01 : f32
    %14 = vector.broadcast %cst_13 : f32 to vector<8x324xf32>
    %15 = arith.cmpf oge, %10, %14 : vector<8x324xf32>
    %cst_14 = arith.constant 1.000000e+00 : f32
    %16 = vector.broadcast %cst_14 : f32 to vector<8x324xf32>
    %cst_15 = arith.constant -2.000000e+00 : f32
    %17 = vector.broadcast %cst_15 : f32 to vector<8x324xf32>
    %18 = arith.mulf %17, %10 : vector<8x324xf32>
    %19 = arith.mulf %18, %10 : vector<8x324xf32>
    %20 = arith.mulf %19, %10 : vector<8x324xf32>
    %cst_16 = arith.constant 1.500000e+00 : f32
    %21 = vector.broadcast %cst_16 : f32 to vector<8x324xf32>
    %22 = arith.mulf %21, %10 : vector<8x324xf32>
    %23 = arith.addf %20, %22 : vector<8x324xf32>
    %cst_17 = arith.constant 5.000000e-01 : f32
    %24 = vector.broadcast %cst_17 : f32 to vector<8x324xf32>
    %25 = arith.addf %23, %24 : vector<8x324xf32>
    %26 = arith.select %15, %16, %25 : vector<8x324xi1>, vector<8x324xf32>
    %27 = arith.select %12, %13, %26 : vector<8x324xi1>, vector<8x324xf32>
    %c0_18 = arith.constant 0 : index
    %c0_19 = arith.constant 0 : index
    %28 = vector.load %arg5[%c0_18, %c0_19] : memref<2x8xf32, #tpu.memory_space<vmem>>, vector<2x8xf32>
    %c0_20 = arith.constant 0 : index
    %c0_21 = arith.constant 0 : index
    %29 = vector.load %arg6[%c0_20, %c0_21] : memref<324x36xf32, #tpu.memory_space<vmem>>, vector<324x36xf32>
    %c0_22 = arith.constant 0 : index
    %c0_23 = arith.constant 0 : index
    %c0_24 = arith.constant 0 : index
    %30 = vector.load %arg4[%c0_22, %c0_23, %c0_24] : memref<4x8x324xf32, #tpu.memory_space<vmem>>, vector<1x8x324xf32>
    %31 = vector.shape_cast %30 : vector<1x8x324xf32> to vector<8x324xf32>
    %32 = arith.mulf %31, %27 : vector<8x324xf32>
    %cst_25 = arith.constant dense<0.000000e+00> : vector<2x324xf32>
    %33 = tpu.matmul %28, %32, %cst_25 {dimension_numbers = #tpu.dot_dimension_numbers<[1], [0], [0], [1], [0, 0, 1, 1], [], []>} : vector<2x8xf32>, vector<8x324xf32>, vector<2x324xf32> -> vector<2x324xf32>
    %cst_26 = arith.constant dense<0.000000e+00> : vector<2x36xf32>
    %34 = tpu.matmul %33, %29, %cst_26 {dimension_numbers = #tpu.dot_dimension_numbers<[1], [0], [0], [1], [0, 0, 1, 1], [], []>} : vector<2x324xf32>, vector<324x36xf32>, vector<2x36xf32> -> vector<2x36xf32>
    %c0_27 = arith.constant 0 : index
    %c0_28 = arith.constant 0 : index
    %c0_29 = arith.constant 0 : index
    %35 = vector.load %arg7[%c0_27, %c0_28, %c0_29] : memref<4x2x36xf32, #tpu.memory_space<vmem>>, vector<1x2x36xf32>
    %36 = vector.shape_cast %35 : vector<1x2x36xf32> to vector<2x36xf32>
    %37 = vector.shape_cast %34 : vector<2x36xf32> to vector<1x2x36xf32>
    tpu.vector_store %arg7[%c0_27, %c0_28, %c0_29], %37 {strides = array<i32>} : memref<4x2x36xf32, #tpu.memory_space<vmem>>, vector<1x2x36xf32>,
    %c1 = arith.constant 1 : index
    %c0_30 = arith.constant 0 : index
    %c0_31 = arith.constant 0 : index
    %38 = vector.load %arg4[%c1, %c0_30, %c0_31] : memref<4x8x324xf32, #tpu.memory_space<vmem>>, vector<1x8x324xf32>
    %39 = vector.shape_cast %38 : vector<1x8x324xf32> to vector<8x324xf32>
    %40 = arith.mulf %39, %27 : vector<8x324xf32>
    %cst_32 = arith.constant dense<0.000000e+00> : vector<2x324xf32>
    %41 = tpu.matmul %28, %40, %cst_32 {dimension_numbers = #tpu.dot_dimension_numbers<[1], [0], [0], [1], [0, 0, 1, 1], [], []>} : vector<2x8xf32>, vector<8x324xf32>, vector<2x324xf32> -> vector<2x324xf32>
    %cst_33 = arith.constant dense<0.000000e+00> : vector<2x36xf32>
    %42 = tpu.matmul %41, %29, %cst_33 {dimension_numbers = #tpu.dot_dimension_numbers<[1], [0], [0], [1], [0, 0, 1, 1], [], []>} : vector<2x324xf32>, vector<324x36xf32>, vector<2x36xf32> -> vector<2x36xf32>
    %c1_34 = arith.constant 1 : index
    %c0_35 = arith.constant 0 : index
    %c0_36 = arith.constant 0 : index
    %43 = vector.load %arg7[%c1_34, %c0_35, %c0_36] : memref<4x2x36xf32, #tpu.memory_space<vmem>>, vector<1x2x36xf32>
    %44 = vector.shape_cast %43 : vector<1x2x36xf32> to vector<2x36xf32>
    %45 = vector.shape_cast %42 : vector<2x36xf32> to vector<1x2x36xf32>
    tpu.vector_store %arg7[%c1_34, %c0_35, %c0_36], %45 {strides = array<i32>} : memref<4x2x36xf32, #tpu.memory_space<vmem>>, vector<1x2x36xf32>,
    %c2 = arith.constant 2 : index
    %c0_37 = arith.constant 0 : index
    %c0_38 = arith.constant 0 : index
    %46 = vector.load %arg4[%c2, %c0_37, %c0_38] : memref<4x8x324xf32, #tpu.memory_space<vmem>>, vector<1x8x324xf32>
    %47 = vector.shape_cast %46 : vector<1x8x324xf32> to vector<8x324xf32>
    %48 = arith.mulf %47, %27 : vector<8x324xf32>
    %cst_39 = arith.constant dense<0.000000e+00> : vector<2x324xf32>
    %49 = tpu.matmul %28, %48, %cst_39 {dimension_numbers = #tpu.dot_dimension_numbers<[1], [0], [0], [1], [0, 0, 1, 1], [], []>} : vector<2x8xf32>, vector<8x324xf32>, vector<2x324xf32> -> vector<2x324xf32>
    %cst_40 = arith.constant dense<0.000000e+00> : vector<2x36xf32>
    %50 = tpu.matmul %49, %29, %cst_40 {dimension_numbers = #tpu.dot_dimension_numbers<[1], [0], [0], [1], [0, 0, 1, 1], [], []>} : vector<2x324xf32>, vector<324x36xf32>, vector<2x36xf32> -> vector<2x36xf32>
    %c2_41 = arith.constant 2 : index
    %c0_42 = arith.constant 0 : index
    %c0_43 = arith.constant 0 : index
    %51 = vector.load %arg7[%c2_41, %c0_42, %c0_43] : memref<4x2x36xf32, #tpu.memory_space<vmem>>, vector<1x2x36xf32>
    %52 = vector.shape_cast %51 : vector<1x2x36xf32> to vector<2x36xf32>
    %53 = vector.shape_cast %50 : vector<2x36xf32> to vector<1x2x36xf32>
    tpu.vector_store %arg7[%c2_41, %c0_42, %c0_43], %53 {strides = array<i32>} : memref<4x2x36xf32, #tpu.memory_space<vmem>>, vector<1x2x36xf32>,
    %c3 = arith.constant 3 : index
    %c0_44 = arith.constant 0 : index
    %c0_45 = arith.constant 0 : index
    %54 = vector.load %arg4[%c3, %c0_44, %c0_45] : memref<4x8x324xf32, #tpu.memory_space<vmem>>, vector<1x8x324xf32>
    %55 = vector.shape_cast %54 : vector<1x8x324xf32> to vector<8x324xf32>
    %56 = arith.mulf %55, %27 : vector<8x324xf32>
    %cst_46 = arith.constant dense<0.000000e+00> : vector<2x324xf32>
    %57 = tpu.matmul %28, %56, %cst_46 {dimension_numbers = #tpu.dot_dimension_numbers<[1], [0], [0], [1], [0, 0, 1, 1], [], []>} : vector<2x8xf32>, vector<8x324xf32>, vector<2x324xf32> -> vector<2x324xf32>
    %cst_47 = arith.constant dense<0.000000e+00> : vector<2x36xf32>
    %58 = tpu.matmul %57, %29, %cst_47 {dimension_numbers = #tpu.dot_dimension_numbers<[1], [0], [0], [1], [0, 0, 1, 1], [], []>} : vector<2x324xf32>, vector<324x36xf32>, vector<2x36xf32> -> vector<2x36xf32>
    %c3_48 = arith.constant 3 : index
    %c0_49 = arith.constant 0 : index
    %c0_50 = arith.constant 0 : index
    %59 = vector.load %arg7[%c3_48, %c0_49, %c0_50] : memref<4x2x36xf32, #tpu.memory_space<vmem>>, vector<1x2x36xf32>
    %60 = vector.shape_cast %59 : vector<1x2x36xf32> to vector<2x36xf32>
    %61 = vector.shape_cast %58 : vector<2x36xf32> to vector<1x2x36xf32>
    tpu.vector_store %arg7[%c3_48, %c0_49, %c0_50], %61 {strides = array<i32>} : memref<4x2x36xf32, #tpu.memory_space<vmem>>, vector<1x2x36xf32>,
    return
  }
}

</mosaic_0001>

<llo_original>
// kernel: tpu_custom_call.1
$region0: #{tpu_custom_call.1}
  #allocation0 [shape = 'u32[]', space=smem, size = 0x4, offset = 0x4, fixed_abs, tag = 'smem constant byte address 0x4 - core index']
  #allocation1 [shape = 'u32[144,128]{1,0:T(1,128)}', space=vmem, size = 0x12000, scoped, tag = 'internal scratch']
  %s0 = inlined_call_operand.vmem [shape: f32[8,64], index: 0, kind: input, shape index: {}]
  %s1 = inlined_call_operand.vmem [shape: f32[64,288], index: 1, kind: input, shape index: {}]
  %s2 = inlined_call_operand.hbm [shape: f32[288,288], index: 2, kind: input, shape index: {}]
  %s3 = inlined_call_operand.hbm [shape: f32[288,324], index: 3, kind: input, shape index: {}]
  %s4 = inlined_call_operand.vmem [shape: f32[4,8,324], index: 4, kind: input, shape index: {}]
  %s5 = inlined_call_operand.vmem [shape: f32[2,8], index: 5, kind: input, shape index: {}]
  %s6 = inlined_call_operand.vmem [shape: f32[324,36], index: 6, kind: input, shape index: {}]
  %s7 = inlined_call_operand.hbm [shape: f32[4,2,36], index: 7, kind: output, shape index: {}]
  %s8 = sld [smem:[#allocation0]]
  $region46: #{tpu_custom_call.1} parent=0
    _
  %s10 = ssub.s32 1, %s8
  %s11 = scalar_select 0, %s10, %s8
  $region1: #{tpu_custom_call.1} parent=0
    #allocation2 [shape = 'u8[442368]{0}', space=vmem, size = 0x6c000, scoped, tag = 'input window, operand 2, single buffered']
    #allocation3 [shape = 's32[1]{0}', space=sflag, size = 0x4, scoped, tag = 'scoped memory for tpu_custom_call.1']
    #allocation4 [shape = 's32[1]{0}', space=sflag, size = 0x4, scoped, tag = 'scoped memory for tpu_custom_call.1']
    #allocation5 [shape = 'u8[442368]{0}', space=vmem, size = 0x6c000, scoped, tag = 'input window, operand 3, single buffered']
    #allocation6 [shape = 's32[1]{0}', space=sflag, size = 0x4, scoped, tag = 'scoped memory for tpu_custom_call.1']
    #allocation7 [shape = 'u8[4096]{0}', space=vmem, size = 0x1000, scoped, tag = 'output window, operand 0, single buffered']
    %12 = vsyncpa [#allocation3], 0
    %13 = vsyncpa [#allocation6], 0
    %14 = vsyncpa [#allocation4], 0
    // Predicated region
    $region2: #{tpu_custom_call.1} parent=1 // pred_check
      _
    $region3: #{tpu_custom_call.1} parent=1 // pred_check_branch
      %16 = sbr.rel (0) target = $region5
    $region4: #{tpu_custom_call.1} parent=1 // pred_region
      _
    $region5: #{tpu_custom_call.1} parent=1 // pred_fallthru
      _
    // Predicated region
    $region6: #{tpu_custom_call.1} parent=1 // pred_check
      _
    $region7: #{tpu_custom_call.1} parent=1 // pred_check_branch
      %18 = sbr.rel (0) target = $region9
    $region8: #{tpu_custom_call.1} parent=1 // pred_region
      _
    $region9: #{tpu_custom_call.1} parent=1 // pred_fallthru
      _
    // Predicated region
    $region10: #{tpu_custom_call.1} parent=1 // pred_check
      _
    $region11: #{tpu_custom_call.1} parent=1 // pred_check_branch
      %20 = sbr.rel (0) target = $region13
    $region12: #{tpu_custom_call.1} parent=1 // pred_region
      %s22 = ssub.s32 13824, 13824
      %23 = vsyncadd [#allocation3], %s22
      %s24 = sshll.u32 [#allocation2], 4
      %s25 = int_to_ptr.vmem [resolvable:$true] %s24
      %30 = dma.hbm_to_vmem [thread:$0]  %s2, 13824, %s25, [#allocation3], 384, 384, 24
    $region13: #{tpu_custom_call.1} parent=1 // pred_fallthru
      _
    // Predicated region
    $region14: #{tpu_custom_call.1} parent=1 // pred_check
      _
    $region15: #{tpu_custom_call.1} parent=1 // pred_check_branch
      %32 = sbr.rel (0) target = $region17
    $region16: #{tpu_custom_call.1} parent=1 // pred_region
      %s34 = ssub.s32 13824, 13824
      %35 = vsyncadd [#allocation6], %s34
      %s36 = sshll.u32 [#allocation5], 4
      %s37 = int_to_ptr.vmem [resolvable:$true] %s36
      %42 = dma.hbm_to_vmem [thread:$0]  %s3, 13824, %s37, [#allocation6], 384, 384, 24
    $region17: #{tpu_custom_call.1} parent=1 // pred_fallthru
      _
    // Predicated region
    $region18: #{tpu_custom_call.1} parent=1 // pred_check
      _
    $region19: #{tpu_custom_call.1} parent=1 // pred_check_branch
      %44 = sbr.rel (0) target = $region21
    $region20: #{tpu_custom_call.1} parent=1 // pred_region
      _
    $region21: #{tpu_custom_call.1} parent=1 // pred_fallthru
      _
    // Predicated region
    $region22: #{tpu_custom_call.1} parent=1 // pred_check
      _
    $region23: #{tpu_custom_call.1} parent=1 // pred_check_branch
      %46 = sbr.rel (0) target = $region25
    $region24: #{tpu_custom_call.1} parent=1 // pred_region
      _
    $region25: #{tpu_custom_call.1} parent=1 // pred_fallthru
      _
    // Predicated region
    $region26: #{tpu_custom_call.1} parent=1 // pred_check
      _
    $region27: #{tpu_custom_call.1} parent=1 // pred_check_branch
      %48 = sbr.rel (0) target = $region29
    $region28: #{tpu_custom_call.1} parent=1 // pred_region
      _
    $region29: #{tpu_custom_call.1} parent=1 // pred_fallthru
      _
    // Predicated region
    $region30: #{tpu_custom_call.1} parent=1 // pred_check
      _
    $region31: #{tpu_custom_call.1} parent=1 // pred_check_branch
      %50 = sbr.rel (0) target = $region33
    $region32: #{tpu_custom_call.1} parent=1 // pred_region
      %51 = dma.done [#allocation3], 13824
    $region33: #{tpu_custom_call.1} parent=1 // pred_fallthru
      _
    // Predicated region
    $region34: #{tpu_custom_call.1} parent=1 // pred_check
      _
    $region35: #{tpu_custom_call.1} parent=1 // pred_check_branch
      %53 = sbr.rel (0) target = $region37
    $region36: #{tpu_custom_call.1} parent=1 // pred_region
      %54 = dma.done [#allocation6], 13824
    $region37: #{tpu_custom_call.1} parent=1 // pred_fallthru
      _
    %v55 = vld [vmem:[%s0] sm:$0xff]
    %v56 = vld [vmem:[%s1] sm:$0xff]
    %v57 = vld [vmem:[%s1 + $0x8] sm:$0xff]
    %v58 = vld [vmem:[%s1 + $0x10] sm:$0xff]
    %v59 = vld [vmem:[%s1 + $0x18] sm:$0xff]
    %v60 = vld [vmem:[%s1 + $0x20] sm:$0xff]
    %v61 = vld [vmem:[%s1 + $0x28] sm:$0xff]
    %v62 = vld [vmem:[%s1 + $0x30] sm:$0xff]
    %v63 = vld [vmem:[%s1 + $0x38] sm:$0xff]
    %v64 = vld [vmem:[%s1 + $0x40] sm:$0xff]
    %v65 = vld [vmem:[%s1 + $0x48] sm:$0xff]
    %v66 = vld [vmem:[%s1 + $0x50] sm:$0xff]
    %v67 = vld [vmem:[%s1 + $0x58] sm:$0xff]
    %v68 = vld [vmem:[%s1 + $0x60] sm:$0xff]
    %v69 = vld [vmem:[%s1 + $0x68] sm:$0xff]
    %v70 = vld [vmem:[%s1 + $0x70] sm:$0xff]
    %v71 = vld [vmem:[%s1 + $0x78] sm:$0xff]
    %v72 = vld [vmem:[%s1 + $0x80] sm:$0xff]
    %v73 = vld [vmem:[%s1 + $0x88] sm:$0xff]
    %v74 = vld [vmem:[%s1 + $0x90] sm:$0xff]
    %v75 = vld [vmem:[%s1 + $0x98] sm:$0xff]
    %v76 = vld [vmem:[%s1 + $0xa0] sm:$0xff]
    %v77 = vld [vmem:[%s1 + $0xa8] sm:$0xff]
    %v78 = vld [vmem:[%s1 + $0xb0] sm:$0xff]
    %v79 = vld [vmem:[%s1 + $0xb8] sm:$0xff]
    %vm80 = vcmask 523264
    %v82 = vsel %vm80, %v55, 0
    %84 = vmatprep.subr.mxu0 %v57
    %85 = vmatpush1.msra.mxu0 %v56
    %86 = vmatprep.subr.mxu0 %v60
    %87 = vmatpush1.msra.mxu0 %v59
    %88 = vmatprep.subr.mxu0 %v63
    %89 = vmatpush1.msra.mxu0 %v62
    %90 = vmatprep.subr.mxu0 %v66
    %91 = vmatpush1.msra.mxu0 %v65
    %92 = vmatprep.subr.mxu0 %v69
    %93 = vmatpush1.msra.mxu0 %v68
    %94 = vmatprep.subr.mxu0 %v72
    %95 = vmatpush1.msra.mxu0 %v71
    %96 = vmatprep.subr.mxu0 %v75
    %97 = vmatpush1.msra.mxu0 %v74
    %98 = vmatprep.subr.mxu0 %v78
    %99 = vmatpush1.msra.mxu0 %v77
    %100 = vmatprep.subr.mxu0 0.0
    %101 = vmatpush1.msra.mxu0 0.0
    %102 = vmatprep.subr.mxu0 0.0
    %103 = vmatpush1.msra.mxu0 0.0
    %104 = vmatprep.subr.mxu0 0.0
    %105 = vmatpush1.msra.mxu0 0.0
    %106 = vmatprep.subr.mxu0 0.0
    %107 = vmatpush1.msra.mxu0 0.0
    %108 = vmatprep.subr.mxu0 0.0
    %109 = vmatpush1.msra.mxu0 0.0
    %110 = vmatprep.subr.mxu0 0.0
    %111 = vmatpush1.msra.mxu0 0.0
    %112 = vmatprep.subr.mxu0 0.0
    %113 = vmatpush1.msra.mxu0 0.0
    %114 = vmatprep.subr.mxu0 0.0
    %115 = vmatpush1.msra.mxu0 0.0
    %116 = vmatprep.subr.mxu0 0.0
    %117 = vmatpush1.msra.mxu0 0.0
    %118 = vmatprep.subr.mxu0 0.0
    %119 = vmatpush1.msra.mxu0 0.0
    %120 = vmatprep.subr.mxu0 0.0
    %121 = vmatpush1.msra.mxu0 0.0
    %122 = vmatprep.subr.mxu0 0.0
    %123 = vmatpush1.msra.mxu0 0.0
    %124 = vmatprep.subr.mxu0 0.0
    %125 = vmatpush1.msra.mxu0 0.0
    %126 = vmatprep.subr.mxu0 0.0
    %127 = vmatpush1.msra.mxu0 0.0
    %128 = vmatprep.subr.mxu0 0.0
    %129 = vmatpush1.msra.mxu0 0.0
    %130 = vmatprep.subr.mxu0 0.0
    %131 = vmatpush1.msra.mxu0 0.0
    %132 = vmatprep.subr.mxu0 0.0
    %133 = vmatpush1.msra.mxu0 0.0
    %134 = vmatprep.subr.mxu0 0.0
    %135 = vmatpush1.msra.mxu0 0.0
    %136 = vmatprep.subr.mxu0 0.0
    %137 = vmatpush1.msra.mxu0 0.0
    %138 = vmatprep.subr.mxu0 0.0
    %139 = vmatpush1.msra.mxu0 0.0
    %140 = vmatprep.subr.mxu0 0.0
    %141 = vmatpush1.msra.mxu0 0.0
    %142 = vmatprep.subr.mxu0 0.0
    %143 = vmatpush1.msra.mxu0 0.0
    %144 = vmatprep.subr.mxu0 0.0
    %145 = vmatpush1.msra.mxu0 0.0
    %146 = vmatprep.subr.mxu0 0.0
    %147 = vmatpush1.msra.mxu0 0.0
    %148 = vmatprep.mubr.f32.mxu0 0.0
    %149 = vmatmul.mubr.f32.gmra.mrb[0].mxu0 %v82
    %v150 = vpop.f32.mrb[0].mxu0
    %v151 = vadd.f32 0.0, %v150
    %v152 = vpop.f32.mrb[0].mxu0
    %v153 = vadd.f32 0.0, %v152
    %154 = vdwg.mxu0
    %155 = vmatprep.subr.mxu0 0.0
    %156 = vmatpush1.msra.mxu0 %v58
    %157 = vmatprep.subr.mxu0 0.0
    %158 = vmatpush1.msra.mxu0 %v61
    %159 = vmatprep.subr.mxu0 0.0
    %160 = vmatpush1.msra.mxu0 %v64
    %161 = vmatprep.subr.mxu0 0.0
    %162 = vmatpush1.msra.mxu0 %v67
    %163 = vmatprep.subr.mxu0 0.0
    %164 = vmatpush1.msra.mxu0 %v70
    %165 = vmatprep.subr.mxu0 0.0
    %166 = vmatpush1.msra.mxu0 %v73
    %167 = vmatprep.subr.mxu0 0.0
    %168 = vmatpush1.msra.mxu0 %v76
    %169 = vmatprep.subr.mxu0 0.0
    %170 = vmatpush1.msra.mxu0 %v79
    %171 = vmatprep.subr.mxu0 0.0
    %172 = vmatpush1.msra.mxu0 0.0
    %173 = vmatprep.subr.mxu0 0.0
    %174 = vmatpush1.msra.mxu0 0.0
    %175 = vmatprep.subr.mxu0 0.0
    %176 = vmatpush1.msra.mxu0 0.0
    %177 = vmatprep.subr.mxu0 0.0
    %178 = vmatpush1.msra.mxu0 0.0
    %179 = vmatprep.subr.mxu0 0.0
    %180 = vmatpush1.msra.mxu0 0.0
    %181 = vmatprep.subr.mxu0 0.0
    %182 = vmatpush1.msra.mxu0 0.0
    %183 = vmatprep.subr.mxu0 0.0
    %184 = vmatpush1.msra.mxu0 0.0
    %185 = vmatprep.subr.mxu0 0.0
    %186 = vmatpush1.msra.mxu0 0.0
    %187 = vmatprep.subr.mxu0 0.0
    %188 = vmatpush1.msra.mxu0 0.0
    %189 = vmatprep.subr.mxu0 0.0
    %190 = vmatpush1.msra.mxu0 0.0
    %191 = vmatprep.subr.mxu0 0.0
    %192 = vmatpush1.msra.mxu0 0.0
    %193 = vmatprep.subr.mxu0 0.0
    %194 = vmatpush1.msra.mxu0 0.0
    %195 = vmatprep.subr.mxu0 0.0
    %196 = vmatpush1.msra.mxu0 0.0
    %197 = vmatprep.subr.mxu0 0.0
    %198 = vmatpush1.msra.mxu0 0.0
    %199 = vmatprep.subr.mxu0 0.0
    %200 = vmatpush1.msra.mxu0 0.0
    %201 = vmatprep.subr.mxu0 0.0
    %202 = vmatpush1.msra.mxu0 0.0
    %203 = vmatprep.subr.mxu0 0.0
    %204 = vmatpush1.msra.mxu0 0.0
    %205 = vmatprep.subr.mxu0 0.0
    %206 = vmatpush1.msra.mxu0 0.0
    %207 = vmatprep.subr.mxu0 0.0
    %208 = vmatpush1.msra.mxu0 0.0
    %209 = vmatprep.subr.mxu0 0.0
    %210 = vmatpush1.msra.mxu0 0.0
    %211 = vmatprep.subr.mxu0 0.0
    %212 = vmatpush1.msra.mxu0 0.0
    %213 = vmatprep.subr.mxu0 0.0
    %214 = vmatpush1.msra.mxu0 0.0
    %215 = vmatprep.subr.mxu0 0.0
    %216 = vmatpush1.msra.mxu0 0.0
    %217 = vmatprep.subr.mxu0 0.0
    %218 = vmatpush1.msra.mxu0 0.0
    %219 = vmatprep.mubr.f32.mxu0 0.0
    %220 = vmatmul.mubr.f32.gmra.mrb[0].mxu0 %v82
    %v221 = vpop.f32.mrb[0].mxu0
    %v222 = vadd.f32 0.0, %v221
    %v223 = vpop.f32.mrb[0].mxu0
    %224 = vdwg.mxu0
    %v225 = vmax.f32 %v151, 0.0
    %v226 = vmax.f32 %v153, 0.0
    %v227 = vmax.f32 %v222, 0.0
    %v228 = vld [vmem:[#allocation2] sm:$0xff]
    %v229 = vld [vmem:[#allocation2 + $0x8] sm:$0xff]
    %v230 = vld [vmem:[#allocation2 + $0x10] sm:$0xff]
    %v231 = vld [vmem:[#allocation2 + $0x18] sm:$0xff]
    %v232 = vld [vmem:[#allocation2 + $0x20] sm:$0xff]
    %v233 = vld [vmem:[#allocation2 + $0x28] sm:$0xff]
    %v234 = vld [vmem:[#allocation2 + $0x30] sm:$0xff]
    %v235 = vld [vmem:[#allocation2 + $0x38] sm:$0xff]
    %v236 = vld [vmem:[#allocation2 + $0x40] sm:$0xff]
    %v237 = vld [vmem:[#allocation2 + $0x48] sm:$0xff]
    %v238 = vld [vmem:[#allocation2 + $0x50] sm:$0xff]
    %v239 = vld [vmem:[#allocation2 + $0x58] sm:$0xff]
    %v240 = vld [vmem:[#allocation2 + $0x60] sm:$0xff]
    %v241 = vld [vmem:[#allocation2 + $0x68] sm:$0xff]
    %v242 = vld [vmem:[#allocation2 + $0x70] sm:$0xff]
    %v243 = vld [vmem:[#allocation2 + $0x78] sm:$0xff]
    %v244 = vld [vmem:[#allocation2 + $0x80] sm:$0xff]
    %v245 = vld [vmem:[#allocation2 + $0x88] sm:$0xff]
    %v246 = vld [vmem:[#allocation2 + $0x90] sm:$0xff]
    %v247 = vld [vmem:[#allocation2 + $0x98] sm:$0xff]
    %v248 = vld [vmem:[#allocation2 + $0xa0] sm:$0xff]
    %v249 = vld [vmem:[#allocation2 + $0xa8] sm:$0xff]
    %v250 = vld [vmem:[#allocation2 + $0xb0] sm:$0xff]
    %v251 = vld [vmem:[#allocation2 + $0xb8] sm:$0xff]
    %v252 = vld [vmem:[#allocation2 + $0xc0] sm:$0xff]
    %v253 = vld [vmem:[#allocation2 + $0xc8] sm:$0xff]
    %v254 = vld [vmem:[#allocation2 + $0xd0] sm:$0xff]
    %v255 = vld [vmem:[#allocation2 + $0xd8] sm:$0xff]
    %v256 = vld [vmem:[#allocation2 + $0xe0] sm:$0xff]
    %v257 = vld [vmem:[#allocation2 + $0xe8] sm:$0xff]
    %v258 = vld [vmem:[#allocation2 + $0xf0] sm:$0xff]
    %v259 = vld [vmem:[#allocation2 + $0xf8] sm:$0xff]
    %v260 = vld [vmem:[#allocation2 + $0x100] sm:$0xff]
    %v261 = vld [vmem:[#allocation2 + $0x108] sm:$0xff]
    %v262 = vld [vmem:[#allocation2 + $0x110] sm:$0xff]
    %v263 = vld [vmem:[#allocation2 + $0x118] sm:$0xff]
    %v264 = vld [vmem:[#allocation2 + $0x120] sm:$0xff]
    %v265 = vld [vmem:[#allocation2 + $0x128] sm:$0xff]
    %v266 = vld [vmem:[#allocation2 + $0x130] sm:$0xff]
    %v267 = vld [vmem:[#allocation2 + $0x138] sm:$0xff]
    %v268 = vld [vmem:[#allocation2 + $0x140] sm:$0xff]
    %v269 = vld [vmem:[#allocation2 + $0x148] sm:$0xff]
    %v270 = vld [vmem:[#allocation2 + $0x150] sm:$0xff]
    %v271 = vld [vmem:[#allocation2 + $0x158] sm:$0xff]
    %v272 = vld [vmem:[#allocation2 + $0x160] sm:$0xff]
    %v273 = vld [vmem:[#allocation2 + $0x168] sm:$0xff]
    %v274 = vld [vmem:[#allocation2 + $0x170] sm:$0xff]
    %v275 = vld [vmem:[#allocation2 + $0x178] sm:$0xff]
    %v276 = vld [vmem:[#allocation2 + $0x180] sm:$0xff]
    %v277 = vld [vmem:[#allocation2 + $0x188] sm:$0xff]
    %v278 = vld [vmem:[#allocation2 + $0x190] sm:$0xff]
    %v279 = vld [vmem:[#allocation2 + $0x198] sm:$0xff]
    %v280 = vld [vmem:[#allocation2 + $0x1a0] sm:$0xff]
    %v281 = vld [vmem:[#allocation2 + $0x1a8] sm:$0xff]
    %v282 = vld [vmem:[#allocation2 + $0x1b0] sm:$0xff]
    %v283 = vld [vmem:[#allocation2 + $0x1b8] sm:$0xff]
    %v284 = vld [vmem:[#allocation2 + $0x1c0] sm:$0xff]
    %v285 = vld [vmem:[#allocation2 + $0x1c8] sm:$0xff]
    %v286 = vld [vmem:[#allocation2 + $0x1d0] sm:$0xff]
    %v287 = vld [vmem:[#allocation2 + $0x1d8] sm:$0xff]
    %v288 = vld [vmem:[#allocation2 + $0x1e0] sm:$0xff]
    %v289 = vld [vmem:[#allocation2 + $0x1e8] sm:$0xff]
    %v290 = vld [vmem:[#allocation2 + $0x1f0] sm:$0xff]
    %v291 = vld [vmem:[#allocation2 + $0x1f8] sm:$0xff]
    %v292 = vld [vmem:[#allocation2 + $0x200] sm:$0xff]
    %v293 = vld [vmem:[#allocation2 + $0x208] sm:$0xff]
    %v294 = vld [vmem:[#allocation2 + $0x210] sm:$0xff]
    %v295 = vld [vmem:[#allocation2 + $0x218] sm:$0xff]
    %v296 = vld [vmem:[#allocation2 + $0x220] sm:$0xff]
    %v297 = vld [vmem:[#allocation2 + $0x228] sm:$0xff]
    %v298 = vld [vmem:[#allocation2 + $0x230] sm:$0xff]
    %v299 = vld [vmem:[#allocation2 + $0x238] sm:$0xff]
    %v300 = vld [vmem:[#allocation2 + $0x240] sm:$0xff]
    %v301 = vld [vmem:[#allocation2 + $0x248] sm:$0xff]
    %v302 = vld [vmem:[#allocation2 + $0x250] sm:$0xff]
    %v303 = vld [vmem:[#allocation2 + $0x258] sm:$0xff]
    %v304 = vld [vmem:[#allocation2 + $0x260] sm:$0xff]
    %v305 = vld [vmem:[#allocation2 + $0x268] sm:$0xff]
    %v306 = vld [vmem:[#allocation2 + $0x270] sm:$0xff]
    %v307 = vld [vmem:[#allocation2 + $0x278] sm:$0xff]
    %v308 = vld [vmem:[#allocation2 + $0x280] sm:$0xff]
    %v309 = vld [vmem:[#allocation2 + $0x288] sm:$0xff]
    %v310 = vld [vmem:[#allocation2 + $0x290] sm:$0xff]
    %v311 = vld [vmem:[#allocation2 + $0x298] sm:$0xff]
    %v312 = vld [vmem:[#allocation2 + $0x2a0] sm:$0xff]
    %v313 = vld [vmem:[#allocation2 + $0x2a8] sm:$0xff]
    %v314 = vld [vmem:[#allocation2 + $0x2b0] sm:$0xff]
    %v315 = vld [vmem:[#allocation2 + $0x2b8] sm:$0xff]
    %v316 = vld [vmem:[#allocation2 + $0x2c0] sm:$0xff]
    %v317 = vld [vmem:[#allocation2 + $0x2c8] sm:$0xff]
    %v318 = vld [vmem:[#allocation2 + $0x2d0] sm:$0xff]
    %v319 = vld [vmem:[#allocation2 + $0x2d8] sm:$0xff]
    %v320 = vld [vmem:[#allocation2 + $0x2e0] sm:$0xff]
    %v321 = vld [vmem:[#allocation2 + $0x2e8] sm:$0xff]
    %v322 = vld [vmem:[#allocation2 + $0x2f0] sm:$0xff]
    %v323 = vld [vmem:[#allocation2 + $0x2f8] sm:$0xff]
    %v324 = vld [vmem:[#allocation2 + $0x300] sm:$0xff]
    %v325 = vld [vmem:[#allocation2 + $0x308] sm:$0xff]
    %v326 = vld [vmem:[#allocation2 + $0x310] sm:$0xff]
    %v327 = vld [vmem:[#allocation2 + $0x318] sm:$0xff]
    %v328 = vld [vmem:[#allocation2 + $0x320] sm:$0xff]
    %v329 = vld [vmem:[#allocation2 + $0x328] sm:$0xff]
    %v330 = vld [vmem:[#allocation2 + $0x330] sm:$0xff]
    %v331 = vld [vmem:[#allocation2 + $0x338] sm:$0xff]
    %v332 = vld [vmem:[#allocation2 + $0x340] sm:$0xff]
    %v333 = vld [vmem:[#allocation2 + $0x348] sm:$0xff]
    %v334 = vld [vmem:[#allocation2 + $0x350] sm:$0xff]
    %v335 = vld [vmem:[#allocation2 + $0x358] sm:$0xff]
    %vm336 = vcmask 261120
    %v338 = vsel %vm336, %v227, 0
    %340 = vmatprep.subr.mxu0 %v229
    %341 = vmatpush1.msra.mxu0 %v228
    %342 = vmatprep.subr.mxu0 %v232
    %343 = vmatpush1.msra.mxu0 %v231
    %344 = vmatprep.subr.mxu0 %v235
    %345 = vmatpush1.msra.mxu0 %v234
    %346 = vmatprep.subr.mxu0 %v238
    %347 = vmatpush1.msra.mxu0 %v237
    %348 = vmatprep.subr.mxu0 %v241
    %349 = vmatpush1.msra.mxu0 %v240
    %350 = vmatprep.subr.mxu0 %v244
    %351 = vmatpush1.msra.mxu0 %v243
    %352 = vmatprep.subr.mxu0 %v247
    %353 = vmatpush1.msra.mxu0 %v246
    %354 = vmatprep.subr.mxu0 %v250
    %355 = vmatpush1.msra.mxu0 %v249
    %356 = vmatprep.subr.mxu0 %v253
    %357 = vmatpush1.msra.mxu0 %v252
    %358 = vmatprep.subr.mxu0 %v256
    %359 = vmatpush1.msra.mxu0 %v255
    %360 = vmatprep.subr.mxu0 %v259
    %361 = vmatpush1.msra.mxu0 %v258
    %362 = vmatprep.subr.mxu0 %v262
    %363 = vmatpush1.msra.mxu0 %v261
    %364 = vmatprep.subr.mxu0 %v265
    %365 = vmatpush1.msra.mxu0 %v264
    %366 = vmatprep.subr.mxu0 %v268
    %367 = vmatpush1.msra.mxu0 %v267
    %368 = vmatprep.subr.mxu0 %v271
    %369 = vmatpush1.msra.mxu0 %v270
    %370 = vmatprep.subr.mxu0 %v274
    %371 = vmatpush1.msra.mxu0 %v273
    %372 = vmatprep.subr.mxu0 %v277
    %373 = vmatpush1.msra.mxu0 %v276
    %374 = vmatprep.subr.mxu0 %v280
    %375 = vmatpush1.msra.mxu0 %v279
    %376 = vmatprep.subr.mxu0 %v283
    %377 = vmatpush1.msra.mxu0 %v282
    %378 = vmatprep.subr.mxu0 %v286
    %379 = vmatpush1.msra.mxu0 %v285
    %380 = vmatprep.subr.mxu0 %v289
    %381 = vmatpush1.msra.mxu0 %v288
    %382 = vmatprep.subr.mxu0 %v292
    %383 = vmatpush1.msra.mxu0 %v291
    %384 = vmatprep.subr.mxu0 %v295
    %385 = vmatpush1.msra.mxu0 %v294
    %386 = vmatprep.subr.mxu0 %v298
    %387 = vmatpush1.msra.mxu0 %v297
    %388 = vmatprep.subr.mxu0 %v301
    %389 = vmatpush1.msra.mxu0 %v300
    %390 = vmatprep.subr.mxu0 %v304
    %391 = vmatpush1.msra.mxu0 %v303
    %392 = vmatprep.subr.mxu0 %v307
    %393 = vmatpush1.msra.mxu0 %v306
    %394 = vmatprep.subr.mxu0 %v310
    %395 = vmatpush1.msra.mxu0 %v309
    %396 = vmatprep.subr.mxu0 %v313
    %397 = vmatpush1.msra.mxu0 %v312
    %398 = vmatprep.subr.mxu0 %v316
    %399 = vmatpush1.msra.mxu0 %v315
    %400 = vmatprep.subr.mxu0 %v319
    %401 = vmatpush1.msra.mxu0 %v318
    %402 = vmatprep.subr.mxu0 %v322
    %403 = vmatpush1.msra.mxu0 %v321
    %404 = vmatprep.mubr.f32.mxu0 %v226
    %405 = vmatmul.mubr.f32.gmra.mrb[0].mxu0 %v225
    %v406 = vpop.f32.mrb[0].mxu0
    %v407 = vadd.f32 0.0, %v406
    %v408 = vpop.f32.mrb[0].mxu0
    %v409 = vadd.f32 0.0, %v408
    %410 = vdwg.mxu0
    %411 = vmatprep.subr.mxu0 %v325
    %412 = vmatpush1.msra.mxu0 %v324
    %413 = vmatprep.subr.mxu0 %v328
    %414 = vmatpush1.msra.mxu0 %v327
    %415 = vmatprep.subr.mxu0 %v331
    %416 = vmatpush1.msra.mxu0 %v330
    %417 = vmatprep.subr.mxu0 %v334
    %418 = vmatpush1.msra.mxu0 %v333
    %419 = vmatprep.subr.mxu0 0.0
    %420 = vmatpush1.msra.mxu0 0.0
    %421 = vmatprep.subr.mxu0 0.0
    %422 = vmatpush1.msra.mxu0 0.0
    %423 = vmatprep.subr.mxu0 0.0
    %424 = vmatpush1.msra.mxu0 0.0
    %425 = vmatprep.subr.mxu0 0.0
    %426 = vmatpush1.msra.mxu0 0.0
    %427 = vmatprep.subr.mxu0 0.0
    %428 = vmatpush1.msra.mxu0 0.0
    %429 = vmatprep.subr.mxu0 0.0
    %430 = vmatpush1.msra.mxu0 0.0
    %431 = vmatprep.subr.mxu0 0.0
    %432 = vmatpush1.msra.mxu0 0.0
    %433 = vmatprep.subr.mxu0 0.0
    %434 = vmatpush1.msra.mxu0 0.0
    %435 = vmatprep.subr.mxu0 0.0
    %436 = vmatpush1.msra.mxu0 0.0
    %437 = vmatprep.subr.mxu0 0.0
    %438 = vmatpush1.msra.mxu0 0.0
    %439 = vmatprep.subr.mxu0 0.0
    %440 = vmatpush1.msra.mxu0 0.0
    %441 = vmatprep.subr.mxu0 0.0
    %442 = vmatpush1.msra.mxu0 0.0
    %443 = vmatprep.subr.mxu0 0.0
    %444 = vmatpush1.msra.mxu0 0.0
    %445 = vmatprep.subr.mxu0 0.0
    %446 = vmatpush1.msra.mxu0 0.0
    %447 = vmatprep.subr.mxu0 0.0
    %448 = vmatpush1.msra.mxu0 0.0
    %449 = vmatprep.subr.mxu0 0.0
    %450 = vmatpush1.msra.mxu0 0.0
    %451 = vmatprep.subr.mxu0 0.0
    %452 = vmatpush1.msra.mxu0 0.0
    %453 = vmatprep.subr.mxu0 0.0
    %454 = vmatpush1.msra.mxu0 0.0
    %455 = vmatprep.subr.mxu0 0.0
    %456 = vmatpush1.msra.mxu0 0.0
    %457 = vmatprep.subr.mxu0 0.0
    %458 = vmatpush1.msra.mxu0 0.0
    %459 = vmatprep.subr.mxu0 0.0
    %460 = vmatpush1.msra.mxu0 0.0
    %461 = vmatprep.subr.mxu0 0.0
    %462 = vmatpush1.msra.mxu0 0.0
    %463 = vmatprep.subr.mxu0 0.0
    %464 = vmatpush1.msra.mxu0 0.0
    %465 = vmatprep.subr.mxu0 0.0
    %466 = vmatpush1.msra.mxu0 0.0
    %467 = vmatprep.subr.mxu0 0.0
    %468 = vmatpush1.msra.mxu0 0.0
    %469 = vmatprep.subr.mxu0 0.0
    %470 = vmatpush1.msra.mxu0 0.0
    %471 = vmatprep.subr.mxu0 0.0
    %472 = vmatpush1.msra.mxu0 0.0
    %473 = vmatprep.subr.mxu0 0.0
    %474 = vmatpush1.msra.mxu0 0.0
    %475 = vmatprep.mubr.f32.mxu0 0.0
    %476 = vmatmul.mubr.f32.gmra.mrb[0].mxu0 %v338
    %v477 = vpop.f32.mrb[0].mxu0
    %v478 = vadd.f32 %v407, %v477
    %v479 = vpop.f32.mrb[0].mxu0
    %v480 = vadd.f32 %v409, %v479
    %481 = vdwg.mxu0
    %482 = vmatprep.subr.mxu0 0.0
    %483 = vmatpush1.msra.mxu0 %v230
    %484 = vmatprep.subr.mxu0 0.0
    %485 = vmatpush1.msra.mxu0 %v233
    %486 = vmatprep.subr.mxu0 0.0
    %487 = vmatpush1.msra.mxu0 %v236
    %488 = vmatprep.subr.mxu0 0.0
    %489 = vmatpush1.msra.mxu0 %v239
    %490 = vmatprep.subr.mxu0 0.0
    %491 = vmatpush1.msra.mxu0 %v242
    %492 = vmatprep.subr.mxu0 0.0
    %493 = vmatpush1.msra.mxu0 %v245
    %494 = vmatprep.subr.mxu0 0.0
    %495 = vmatpush1.msra.mxu0 %v248
    %496 = vmatprep.subr.mxu0 0.0
    %497 = vmatpush1.msra.mxu0 %v251
    %498 = vmatprep.subr.mxu0 0.0
    %499 = vmatpush1.msra.mxu0 %v254
    %500 = vmatprep.subr.mxu0 0.0
    %501 = vmatpush1.msra.mxu0 %v257
    %502 = vmatprep.subr.mxu0 0.0
    %503 = vmatpush1.msra.mxu0 %v260
    %504 = vmatprep.subr.mxu0 0.0
    %505 = vmatpush1.msra.mxu0 %v263
    %506 = vmatprep.subr.mxu0 0.0
    %507 = vmatpush1.msra.mxu0 %v266
    %508 = vmatprep.subr.mxu0 0.0
    %509 = vmatpush1.msra.mxu0 %v269
    %510 = vmatprep.subr.mxu0 0.0
    %511 = vmatpush1.msra.mxu0 %v272
    %512 = vmatprep.subr.mxu0 0.0
    %513 = vmatpush1.msra.mxu0 %v275
    %514 = vmatprep.subr.mxu0 0.0
    %515 = vmatpush1.msra.mxu0 %v278
    %516 = vmatprep.subr.mxu0 0.0
    %517 = vmatpush1.msra.mxu0 %v281
    %518 = vmatprep.subr.mxu0 0.0
    %519 = vmatpush1.msra.mxu0 %v284
    %520 = vmatprep.subr.mxu0 0.0
    %521 = vmatpush1.msra.mxu0 %v287
    %522 = vmatprep.subr.mxu0 0.0
    %523 = vmatpush1.msra.mxu0 %v290
    %524 = vmatprep.subr.mxu0 0.0
    %525 = vmatpush1.msra.mxu0 %v293
    %526 = vmatprep.subr.mxu0 0.0
    %527 = vmatpush1.msra.mxu0 %v296
    %528 = vmatprep.subr.mxu0 0.0
    %529 = vmatpush1.msra.mxu0 %v299
    %530 = vmatprep.subr.mxu0 0.0
    %531 = vmatpush1.msra.mxu0 %v302
    %532 = vmatprep.subr.mxu0 0.0
    %533 = vmatpush1.msra.mxu0 %v305
    %534 = vmatprep.subr.mxu0 0.0
    %535 = vmatpush1.msra.mxu0 %v308
    %536 = vmatprep.subr.mxu0 0.0
    %537 = vmatpush1.msra.mxu0 %v311
    %538 = vmatprep.subr.mxu0 0.0
    %539 = vmatpush1.msra.mxu0 %v314
    %540 = vmatprep.subr.mxu0 0.0
    %541 = vmatpush1.msra.mxu0 %v317
    %542 = vmatprep.subr.mxu0 0.0
    %543 = vmatpush1.msra.mxu0 %v320
    %544 = vmatprep.subr.mxu0 0.0
    %545 = vmatpush1.msra.mxu0 %v323
    %546 = vmatprep.mubr.f32.mxu0 %v226
    %547 = vmatmul.mubr.f32.gmra.mrb[0].mxu0 %v225
    %v548 = vpop.f32.mrb[0].mxu0
    %v549 = vadd.f32 0.0, %v548
    %v550 = vpop.f32.mrb[0].mxu0
    %551 = vdwg.mxu0
    %552 = vmatprep.subr.mxu0 0.0
    %553 = vmatpush1.msra.mxu0 %v326
    %554 = vmatprep.subr.mxu0 0.0
    %555 = vmatpush1.msra.mxu0 %v329
    %556 = vmatprep.subr.mxu0 0.0
    %557 = vmatpush1.msra.mxu0 %v332
    %558 = vmatprep.subr.mxu0 0.0
    %559 = vmatpush1.msra.mxu0 %v335
    %560 = vmatprep.subr.mxu0 0.0
    %561 = vmatpush1.msra.mxu0 0.0
    %562 = vmatprep.subr.mxu0 0.0
    %563 = vmatpush1.msra.mxu0 0.0
    %564 = vmatprep.subr.mxu0 0.0
    %565 = vmatpush1.msra.mxu0 0.0
    %566 = vmatprep.subr.mxu0 0.0
    %567 = vmatpush1.msra.mxu0 0.0
    %568 = vmatprep.subr.mxu0 0.0
    %569 = vmatpush1.msra.mxu0 0.0
    %570 = vmatprep.subr.mxu0 0.0
    %571 = vmatpush1.msra.mxu0 0.0
    %572 = vmatprep.subr.mxu0 0.0
    %573 = vmatpush1.msra.mxu0 0.0
    %574 = vmatprep.subr.mxu0 0.0
    %575 = vmatpush1.msra.mxu0 0.0
    %576 = vmatprep.subr.mxu0 0.0
    %577 = vmatpush1.msra.mxu0 0.0
    %578 = vmatprep.subr.mxu0 0.0
    %579 = vmatpush1.msra.mxu0 0.0
    %580 = vmatprep.subr.mxu0 0.0
    %581 = vmatpush1.msra.mxu0 0.0
    %582 = vmatprep.subr.mxu0 0.0
    %583 = vmatpush1.msra.mxu0 0.0
    %584 = vmatprep.subr.mxu0 0.0
    %585 = vmatpush1.msra.mxu0 0.0
    %586 = vmatprep.subr.mxu0 0.0
    %587 = vmatpush1.msra.mxu0 0.0
    %588 = vmatprep.subr.mxu0 0.0
    %589 = vmatpush1.msra.mxu0 0.0
    %590 = vmatprep.subr.mxu0 0.0
    %591 = vmatpush1.msra.mxu0 0.0
    %592 = vmatprep.subr.mxu0 0.0
    %593 = vmatpush1.msra.mxu0 0.0
    %594 = vmatprep.subr.mxu0 0.0
    %595 = vmatpush1.msra.mxu0 0.0
    %596 = vmatprep.subr.mxu0 0.0
    %597 = vmatpush1.msra.mxu0 0.0
    %598 = vmatprep.subr.mxu0 0.0
    %599 = vmatpush1.msra.mxu0 0.0
    %600 = vmatprep.subr.mxu0 0.0
    %601 = vmatpush1.msra.mxu0 0.0
    %602 = vmatprep.subr.mxu0 0.0
    %603 = vmatpush1.msra.mxu0 0.0
    %604 = vmatprep.subr.mxu0 0.0
    %605 = vmatpush1.msra.mxu0 0.0
    %606 = vmatprep.subr.mxu0 0.0
    %607 = vmatpush1.msra.mxu0 0.0
    %608 = vmatprep.subr.mxu0 0.0
    %609 = vmatpush1.msra.mxu0 0.0
    %610 = vmatprep.subr.mxu0 0.0
    %611 = vmatpush1.msra.mxu0 0.0
    %612 = vmatprep.subr.mxu0 0.0
    %613 = vmatpush1.msra.mxu0 0.0
    %614 = vmatprep.subr.mxu0 0.0
    %615 = vmatpush1.msra.mxu0 0.0
    %616 = vmatprep.mubr.f32.mxu0 0.0
    %617 = vmatmul.mubr.f32.gmra.mrb[0].mxu0 %v338
    %v618 = vpop.f32.mrb[0].mxu0
    %v619 = vadd.f32 %v549, %v618
    %v620 = vpop.f32.mrb[0].mxu0
    %621 = vdwg.mxu0
    %v622 = vmax.f32 %v478, 0.0
    %v623 = vmax.f32 %v480, 0.0
    %v624 = vmax.f32 %v619, 0.0
    %v625 = vld [vmem:[#allocation5] sm:$0xff]
    %v626 = vld [vmem:[#allocation5 + $0x8] sm:$0xff]
    %v627 = vld [vmem:[#allocation5 + $0x10] sm:$0xff]
    %v628 = vld [vmem:[#allocation5 + $0x18] sm:$0xff]
    %v629 = vld [vmem:[#allocation5 + $0x20] sm:$0xff]
    %v630 = vld [vmem:[#allocation5 + $0x28] sm:$0xff]
    %v631 = vld [vmem:[#allocation5 + $0x30] sm:$0xff]
    %v632 = vld [vmem:[#allocation5 + $0x38] sm:$0xff]
    %v633 = vld [vmem:[#allocation5 + $0x40] sm:$0xff]
    %v634 = vld [vmem:[#allocation5 + $0x48] sm:$0xff]
    %v635 = vld [vmem:[#allocation5 + $0x50] sm:$0xff]
    %v636 = vld [vmem:[#allocation5 + $0x58] sm:$0xff]
    %v637 = vld [vmem:[#allocation5 + $0x60] sm:$0xff]
    %v638 = vld [vmem:[#allocation5 + $0x68] sm:$0xff]
    %v639 = vld [vmem:[#allocation5 + $0x70] sm:$0xff]
    %v640 = vld [vmem:[#allocation5 + $0x78] sm:$0xff]
    %v641 = vld [vmem:[#allocation5 + $0x80] sm:$0xff]
    %v642 = vld [vmem:[#allocation5 + $0x88] sm:$0xff]
    %v643 = vld [vmem:[#allocation5 + $0x90] sm:$0xff]
    %v644 = vld [vmem:[#allocation5 + $0x98] sm:$0xff]
    %v645 = vld [vmem:[#allocation5 + $0xa0] sm:$0xff]
    %v646 = vld [vmem:[#allocation5 + $0xa8] sm:$0xff]
    %v647 = vld [vmem:[#allocation5 + $0xb0] sm:$0xff]
    %v648 = vld [vmem:[#allocation5 + $0xb8] sm:$0xff]
    %v649 = vld [vmem:[#allocation5 + $0xc0] sm:$0xff]
    %v650 = vld [vmem:[#allocation5 + $0xc8] sm:$0xff]
    %v651 = vld [vmem:[#allocation5 + $0xd0] sm:$0xff]
    %v652 = vld [vmem:[#allocation5 + $0xd8] sm:$0xff]
    %v653 = vld [vmem:[#allocation5 + $0xe0] sm:$0xff]
    %v654 = vld [vmem:[#allocation5 + $0xe8] sm:$0xff]
    %v655 = vld [vmem:[#allocation5 + $0xf0] sm:$0xff]
    %v656 = vld [vmem:[#allocation5 + $0xf8] sm:$0xff]
    %v657 = vld [vmem:[#allocation5 + $0x100] sm:$0xff]
    %v658 = vld [vmem:[#allocation5 + $0x108] sm:$0xff]
    %v659 = vld [vmem:[#allocation5 + $0x110] sm:$0xff]
    %v660 = vld [vmem:[#allocation5 + $0x118] sm:$0xff]
    %v661 = vld [vmem:[#allocation5 + $0x120] sm:$0xff]
    %v662 = vld [vmem:[#allocation5 + $0x128] sm:$0xff]
    %v663 = vld [vmem:[#allocation5 + $0x130] sm:$0xff]
    %v664 = vld [vmem:[#allocation5 + $0x138] sm:$0xff]
    %v665 = vld [vmem:[#allocation5 + $0x140] sm:$0xff]
    %v666 = vld [vmem:[#allocation5 + $0x148] sm:$0xff]
    %v667 = vld [vmem:[#allocation5 + $0x150] sm:$0xff]
    %v668 = vld [vmem:[#allocation5 + $0x158] sm:$0xff]
    %v669 = vld [vmem:[#allocation5 + $0x160] sm:$0xff]
    %v670 = vld [vmem:[#allocation5 + $0x168] sm:$0xff]
    %v671 = vld [vmem:[#allocation5 + $0x170] sm:$0xff]
    %v672 = vld [vmem:[#allocation5 + $0x178] sm:$0xff]
    %v673 = vld [vmem:[#allocation5 + $0x180] sm:$0xff]
    %v674 = vld [vmem:[#allocation5 + $0x188] sm:$0xff]
    %v675 = vld [vmem:[#allocation5 + $0x190] sm:$0xff]
    %v676 = vld [vmem:[#allocation5 + $0x198] sm:$0xff]
    %v677 = vld [vmem:[#allocation5 + $0x1a0] sm:$0xff]
    %v678 = vld [vmem:[#allocation5 + $0x1a8] sm:$0xff]
    %v679 = vld [vmem:[#allocation5 + $0x1b0] sm:$0xff]
    %v680 = vld [vmem:[#allocation5 + $0x1b8] sm:$0xff]
    %v681 = vld [vmem:[#allocation5 + $0x1c0] sm:$0xff]
    %v682 = vld [vmem:[#allocation5 + $0x1c8] sm:$0xff]
    %v683 = vld [vmem:[#allocation5 + $0x1d0] sm:$0xff]
    %v684 = vld [vmem:[#allocation5 + $0x1d8] sm:$0xff]
    %v685 = vld [vmem:[#allocation5 + $0x1e0] sm:$0xff]
    %v686 = vld [vmem:[#allocation5 + $0x1e8] sm:$0xff]
    %v687 = vld [vmem:[#allocation5 + $0x1f0] sm:$0xff]
    %v688 = vld [vmem:[#allocation5 + $0x1f8] sm:$0xff]
    %v689 = vld [vmem:[#allocation5 + $0x200] sm:$0xff]
    %v690 = vld [vmem:[#allocation5 + $0x208] sm:$0xff]
    %v691 = vld [vmem:[#allocation5 + $0x210] sm:$0xff]
    %v692 = vld [vmem:[#allocation5 + $0x218] sm:$0xff]
    %v693 = vld [vmem:[#allocation5 + $0x220] sm:$0xff]
    %v694 = vld [vmem:[#allocation5 + $0x228] sm:$0xff]
    %v695 = vld [vmem:[#allocation5 + $0x230] sm:$0xff]
    %v696 = vld [vmem:[#allocation5 + $0x238] sm:$0xff]
    %v697 = vld [vmem:[#allocation5 + $0x240] sm:$0xff]
    %v698 = vld [vmem:[#allocation5 + $0x248] sm:$0xff]
    %v699 = vld [vmem:[#allocation5 + $0x250] sm:$0xff]
    %v700 = vld [vmem:[#allocation5 + $0x258] sm:$0xff]
    %v701 = vld [vmem:[#allocation5 + $0x260] sm:$0xff]
    %v702 = vld [vmem:[#allocation5 + $0x268] sm:$0xff]
    %v703 = vld [vmem:[#allocation5 + $0x270] sm:$0xff]
    %v704 = vld [vmem:[#allocation5 + $0x278] sm:$0xff]
    %v705 = vld [vmem:[#allocation5 + $0x280] sm:$0xff]
    %v706 = vld [vmem:[#allocation5 + $0x288] sm:$0xff]
    %v707 = vld [vmem:[#allocation5 + $0x290] sm:$0xff]
    %v708 = vld [vmem:[#allocation5 + $0x298] sm:$0xff]
    %v709 = vld [vmem:[#allocation5 + $0x2a0] sm:$0xff]
    %v710 = vld [vmem:[#allocation5 + $0x2a8] sm:$0xff]
    %v711 = vld [vmem:[#allocation5 + $0x2b0] sm:$0xff]
    %v712 = vld [vmem:[#allocation5 + $0x2b8] sm:$0xff]
    %v713 = vld [vmem:[#allocation5 + $0x2c0] sm:$0xff]
    %v714 = vld [vmem:[#allocation5 + $0x2c8] sm:$0xff]
    %v715 = vld [vmem:[#allocation5 + $0x2d0] sm:$0xff]
    %v716 = vld [vmem:[#allocation5 + $0x2d8] sm:$0xff]
    %v717 = vld [vmem:[#allocation5 + $0x2e0] sm:$0xff]
    %v718 = vld [vmem:[#allocation5 + $0x2e8] sm:$0xff]
    %v719 = vld [vmem:[#allocation5 + $0x2f0] sm:$0xff]
    %v720 = vld [vmem:[#allocation5 + $0x2f8] sm:$0xff]
    %v721 = vld [vmem:[#allocation5 + $0x300] sm:$0xff]
    %v722 = vld [vmem:[#allocation5 + $0x308] sm:$0xff]
    %v723 = vld [vmem:[#allocation5 + $0x310] sm:$0xff]
    %v724 = vld [vmem:[#allocation5 + $0x318] sm:$0xff]
    %v725 = vld [vmem:[#allocation5 + $0x320] sm:$0xff]
    %v726 = vld [vmem:[#allocation5 + $0x328] sm:$0xff]
    %v727 = vld [vmem:[#allocation5 + $0x330] sm:$0xff]
    %v728 = vld [vmem:[#allocation5 + $0x338] sm:$0xff]
    %v729 = vld [vmem:[#allocation5 + $0x340] sm:$0xff]
    %v730 = vld [vmem:[#allocation5 + $0x348] sm:$0xff]
    %v731 = vld [vmem:[#allocation5 + $0x350] sm:$0xff]
    %v732 = vld [vmem:[#allocation5 + $0x358] sm:$0xff]
    %v734 = vsel %vm336, %v624, 0
    %736 = vmatprep.subr.mxu0 %v626
    %737 = vmatpush1.msra.mxu0 %v625
    %738 = vmatprep.subr.mxu0 %v629
    %739 = vmatpush1.msra.mxu0 %v628
    %740 = vmatprep.subr.mxu0 %v632
    %741 = vmatpush1.msra.mxu0 %v631
    %742 = vmatprep.subr.mxu0 %v635
    %743 = vmatpush1.msra.mxu0 %v634
    %744 = vmatprep.subr.mxu0 %v638
    %745 = vmatpush1.msra.mxu0 %v637
    %746 = vmatprep.subr.mxu0 %v641
    %747 = vmatpush1.msra.mxu0 %v640
    %748 = vmatprep.subr.mxu0 %v644
    %749 = vmatpush1.msra.mxu0 %v643
    %750 = vmatprep.subr.mxu0 %v647
    %751 = vmatpush1.msra.mxu0 %v646
    %752 = vmatprep.subr.mxu0 %v650
    %753 = vmatpush1.msra.mxu0 %v649
    %754 = vmatprep.subr.mxu0 %v653
    %755 = vmatpush1.msra.mxu0 %v652
    %756 = vmatprep.subr.mxu0 %v656
    %757 = vmatpush1.msra.mxu0 %v655
    %758 = vmatprep.subr.mxu0 %v659
    %759 = vmatpush1.msra.mxu0 %v658
    %760 = vmatprep.subr.mxu0 %v662
    %761 = vmatpush1.msra.mxu0 %v661
    %762 = vmatprep.subr.mxu0 %v665
    %763 = vmatpush1.msra.mxu0 %v664
    %764 = vmatprep.subr.mxu0 %v668
    %765 = vmatpush1.msra.mxu0 %v667
    %766 = vmatprep.subr.mxu0 %v671
    %767 = vmatpush1.msra.mxu0 %v670
    %768 = vmatprep.subr.mxu0 %v674
    %769 = vmatpush1.msra.mxu0 %v673
    %770 = vmatprep.subr.mxu0 %v677
    %771 = vmatpush1.msra.mxu0 %v676
    %772 = vmatprep.subr.mxu0 %v680
    %773 = vmatpush1.msra.mxu0 %v679
    %774 = vmatprep.subr.mxu0 %v683
    %775 = vmatpush1.msra.mxu0 %v682
    %776 = vmatprep.subr.mxu0 %v686
    %777 = vmatpush1.msra.mxu0 %v685
    %778 = vmatprep.subr.mxu0 %v689
    %779 = vmatpush1.msra.mxu0 %v688
    %780 = vmatprep.subr.mxu0 %v692
    %781 = vmatpush1.msra.mxu0 %v691
    %782 = vmatprep.subr.mxu0 %v695
    %783 = vmatpush1.msra.mxu0 %v694
    %784 = vmatprep.subr.mxu0 %v698
    %785 = vmatpush1.msra.mxu0 %v697
    %786 = vmatprep.subr.mxu0 %v701
    %787 = vmatpush1.msra.mxu0 %v700
    %788 = vmatprep.subr.mxu0 %v704
    %789 = vmatpush1.msra.mxu0 %v703
    %790 = vmatprep.subr.mxu0 %v707
    %791 = vmatpush1.msra.mxu0 %v706
    %792 = vmatprep.subr.mxu0 %v710
    %793 = vmatpush1.msra.mxu0 %v709
    %794 = vmatprep.subr.mxu0 %v713
    %795 = vmatpush1.msra.mxu0 %v712
    %796 = vmatprep.subr.mxu0 %v716
    %797 = vmatpush1.msra.mxu0 %v715
    %798 = vmatprep.subr.mxu0 %v719
    %799 = vmatpush1.msra.mxu0 %v718
    %800 = vmatprep.mubr.f32.mxu0 %v623
    %801 = vmatmul.mubr.f32.gmra.mrb[0].mxu0 %v622
    %v802 = vpop.f32.mrb[0].mxu0
    %v803 = vadd.f32 0.0, %v802
    %v804 = vpop.f32.mrb[0].mxu0
    %v805 = vadd.f32 0.0, %v804
    %806 = vdwg.mxu0
    %807 = vmatprep.subr.mxu0 %v722
    %808 = vmatpush1.msra.mxu0 %v721
    %809 = vmatprep.subr.mxu0 %v725
    %810 = vmatpush1.msra.mxu0 %v724
    %811 = vmatprep.subr.mxu0 %v728
    %812 = vmatpush1.msra.mxu0 %v727
    %813 = vmatprep.subr.mxu0 %v731
    %814 = vmatpush1.msra.mxu0 %v730
    %815 = vmatprep.subr.mxu0 0.0
    %816 = vmatpush1.msra.mxu0 0.0
    %817 = vmatprep.subr.mxu0 0.0
    %818 = vmatpush1.msra.mxu0 0.0
    %819 = vmatprep.subr.mxu0 0.0
    %820 = vmatpush1.msra.mxu0 0.0
    %821 = vmatprep.subr.mxu0 0.0
    %822 = vmatpush1.msra.mxu0 0.0
    %823 = vmatprep.subr.mxu0 0.0
    %824 = vmatpush1.msra.mxu0 0.0
    %825 = vmatprep.subr.mxu0 0.0
    %826 = vmatpush1.msra.mxu0 0.0
    %827 = vmatprep.subr.mxu0 0.0
    %828 = vmatpush1.msra.mxu0 0.0
    %829 = vmatprep.subr.mxu0 0.0
    %830 = vmatpush1.msra.mxu0 0.0
    %831 = vmatprep.subr.mxu0 0.0
    %832 = vmatpush1.msra.mxu0 0.0
    %833 = vmatprep.subr.mxu0 0.0
    %834 = vmatpush1.msra.mxu0 0.0
    %835 = vmatprep.subr.mxu0 0.0
    %836 = vmatpush1.msra.mxu0 0.0
    %837 = vmatprep.subr.mxu0 0.0
    %838 = vmatpush1.msra.mxu0 0.0
    %839 = vmatprep.subr.mxu0 0.0
    %840 = vmatpush1.msra.mxu0 0.0
    %841 = vmatprep.subr.mxu0 0.0
    %842 = vmatpush1.msra.mxu0 0.0
    %843 = vmatprep.subr.mxu0 0.0
    %844 = vmatpush1.msra.mxu0 0.0
    %845 = vmatprep.subr.mxu0 0.0
    %846 = vmatpush1.msra.mxu0 0.0
    %847 = vmatprep.subr.mxu0 0.0
    %848 = vmatpush1.msra.mxu0 0.0
    %849 = vmatprep.subr.mxu0 0.0
    %850 = vmatpush1.msra.mxu0 0.0
    %851 = vmatprep.subr.mxu0 0.0
    %852 = vmatpush1.msra.mxu0 0.0
    %853 = vmatprep.subr.mxu0 0.0
    %854 = vmatpush1.msra.mxu0 0.0
    %855 = vmatprep.subr.mxu0 0.0
    %856 = vmatpush1.msra.mxu0 0.0
    %857 = vmatprep.subr.mxu0 0.0
    %858 = vmatpush1.msra.mxu0 0.0
    %859 = vmatprep.subr.mxu0 0.0
    %860 = vmatpush1.msra.mxu0 0.0
    %861 = vmatprep.subr.mxu0 0.0
    %862 = vmatpush1.msra.mxu0 0.0
    %863 = vmatprep.subr.mxu0 0.0
    %864 = vmatpush1.msra.mxu0 0.0
    %865 = vmatprep.subr.mxu0 0.0
    %866 = vmatpush1.msra.mxu0 0.0
    %867 = vmatprep.subr.mxu0 0.0
    %868 = vmatpush1.msra.mxu0 0.0
    %869 = vmatprep.subr.mxu0 0.0
    %870 = vmatpush1.msra.mxu0 0.0
    %871 = vmatprep.mubr.f32.mxu0 0.0
    %872 = vmatmul.mubr.f32.gmra.mrb[0].mxu0 %v734
    %v873 = vpop.f32.mrb[0].mxu0
    %v874 = vadd.f32 %v803, %v873
    %v875 = vpop.f32.mrb[0].mxu0
    %v876 = vadd.f32 %v805, %v875
    %877 = vdwg.mxu0
    %878 = vmatprep.subr.mxu0 0.0
    %879 = vmatpush1.msra.mxu0 %v627
    %880 = vmatprep.subr.mxu0 0.0
    %881 = vmatpush1.msra.mxu0 %v630
    %882 = vmatprep.subr.mxu0 0.0
    %883 = vmatpush1.msra.mxu0 %v633
    %884 = vmatprep.subr.mxu0 0.0
    %885 = vmatpush1.msra.mxu0 %v636
    %886 = vmatprep.subr.mxu0 0.0
    %887 = vmatpush1.msra.mxu0 %v639
    %888 = vmatprep.subr.mxu0 0.0
    %889 = vmatpush1.msra.mxu0 %v642
    %890 = vmatprep.subr.mxu0 0.0
    %891 = vmatpush1.msra.mxu0 %v645
    %892 = vmatprep.subr.mxu0 0.0
    %893 = vmatpush1.msra.mxu0 %v648
    %894 = vmatprep.subr.mxu0 0.0
    %895 = vmatpush1.msra.mxu0 %v651
    %896 = vmatprep.subr.mxu0 0.0
    %897 = vmatpush1.msra.mxu0 %v654
    %898 = vmatprep.subr.mxu0 0.0
    %899 = vmatpush1.msra.mxu0 %v657
    %900 = vmatprep.subr.mxu0 0.0
    %901 = vmatpush1.msra.mxu0 %v660
    %902 = vmatprep.subr.mxu0 0.0
    %903 = vmatpush1.msra.mxu0 %v663
    %904 = vmatprep.subr.mxu0 0.0
    %905 = vmatpush1.msra.mxu0 %v666
    %906 = vmatprep.subr.mxu0 0.0
    %907 = vmatpush1.msra.mxu0 %v669
    %908 = vmatprep.subr.mxu0 0.0
    %909 = vmatpush1.msra.mxu0 %v672
    %910 = vmatprep.subr.mxu0 0.0
    %911 = vmatpush1.msra.mxu0 %v675
    %912 = vmatprep.subr.mxu0 0.0
    %913 = vmatpush1.msra.mxu0 %v678
    %914 = vmatprep.subr.mxu0 0.0
    %915 = vmatpush1.msra.mxu0 %v681
    %916 = vmatprep.subr.mxu0 0.0
    %917 = vmatpush1.msra.mxu0 %v684
    %918 = vmatprep.subr.mxu0 0.0
    %919 = vmatpush1.msra.mxu0 %v687
    %920 = vmatprep.subr.mxu0 0.0
    %921 = vmatpush1.msra.mxu0 %v690
    %922 = vmatprep.subr.mxu0 0.0
    %923 = vmatpush1.msra.mxu0 %v693
    %924 = vmatprep.subr.mxu0 0.0
    %925 = vmatpush1.msra.mxu0 %v696
    %926 = vmatprep.subr.mxu0 0.0
    %927 = vmatpush1.msra.mxu0 %v699
    %928 = vmatprep.subr.mxu0 0.0
    %929 = vmatpush1.msra.mxu0 %v702
    %930 = vmatprep.subr.mxu0 0.0
    %931 = vmatpush1.msra.mxu0 %v705
    %932 = vmatprep.subr.mxu0 0.0
    %933 = vmatpush1.msra.mxu0 %v708
    %934 = vmatprep.subr.mxu0 0.0
    %935 = vmatpush1.msra.mxu0 %v711
    %936 = vmatprep.subr.mxu0 0.0
    %937 = vmatpush1.msra.mxu0 %v714
    %938 = vmatprep.subr.mxu0 0.0
    %939 = vmatpush1.msra.mxu0 %v717
    %940 = vmatprep.subr.mxu0 0.0
    %941 = vmatpush1.msra.mxu0 %v720
    %942 = vmatprep.mubr.f32.mxu0 %v623
    %943 = vmatmul.mubr.f32.gmra.mrb[0].mxu0 %v622
    %v944 = vpop.f32.mrb[0].mxu0
    %v945 = vadd.f32 0.0, %v944
    %v946 = vpop.f32.mrb[0].mxu0
    %947 = vdwg.mxu0
    %948 = vmatprep.subr.mxu0 0.0
    %949 = vmatpush1.msra.mxu0 %v723
    %950 = vmatprep.subr.mxu0 0.0
    %951 = vmatpush1.msra.mxu0 %v726
    %952 = vmatprep.subr.mxu0 0.0
    %953 = vmatpush1.msra.mxu0 %v729
    %954 = vmatprep.subr.mxu0 0.0
    %955 = vmatpush1.msra.mxu0 %v732
    %956 = vmatprep.subr.mxu0 0.0
    %957 = vmatpush1.msra.mxu0 0.0
    %958 = vmatprep.subr.mxu0 0.0
    %959 = vmatpush1.msra.mxu0 0.0
    %960 = vmatprep.subr.mxu0 0.0
    %961 = vmatpush1.msra.mxu0 0.0
    %962 = vmatprep.subr.mxu0 0.0
    %963 = vmatpush1.msra.mxu0 0.0
    %964 = vmatprep.subr.mxu0 0.0
    %965 = vmatpush1.msra.mxu0 0.0
    %966 = vmatprep.subr.mxu0 0.0
    %967 = vmatpush1.msra.mxu0 0.0
    %968 = vmatprep.subr.mxu0 0.0
    %969 = vmatpush1.msra.mxu0 0.0
    %970 = vmatprep.subr.mxu0 0.0
    %971 = vmatpush1.msra.mxu0 0.0
    %972 = vmatprep.subr.mxu0 0.0
    %973 = vmatpush1.msra.mxu0 0.0
    %974 = vmatprep.subr.mxu0 0.0
    %975 = vmatpush1.msra.mxu0 0.0
    %976 = vmatprep.subr.mxu0 0.0
    %977 = vmatpush1.msra.mxu0 0.0
    %978 = vmatprep.subr.mxu0 0.0
    %979 = vmatpush1.msra.mxu0 0.0
    %980 = vmatprep.subr.mxu0 0.0
    %981 = vmatpush1.msra.mxu0 0.0
    %982 = vmatprep.subr.mxu0 0.0
    %983 = vmatpush1.msra.mxu0 0.0
    %984 = vmatprep.subr.mxu0 0.0
    %985 = vmatpush1.msra.mxu0 0.0
    %986 = vmatprep.subr.mxu0 0.0
    %987 = vmatpush1.msra.mxu0 0.0
    %988 = vmatprep.subr.mxu0 0.0
    %989 = vmatpush1.msra.mxu0 0.0
    %990 = vmatprep.subr.mxu0 0.0
    %991 = vmatpush1.msra.mxu0 0.0
    %992 = vmatprep.subr.mxu0 0.0
    %993 = vmatpush1.msra.mxu0 0.0
    %994 = vmatprep.subr.mxu0 0.0
    %995 = vmatpush1.msra.mxu0 0.0
    %996 = vmatprep.subr.mxu0 0.0
    %997 = vmatpush1.msra.mxu0 0.0
    %998 = vmatprep.subr.mxu0 0.0
    %999 = vmatpush1.msra.mxu0 0.0
    %1000 = vmatprep.subr.mxu0 0.0
    %1001 = vmatpush1.msra.mxu0 0.0
    %1002 = vmatprep.subr.mxu0 0.0
    %1003 = vmatpush1.msra.mxu0 0.0
    %1004 = vmatprep.subr.mxu0 0.0
    %1005 = vmatpush1.msra.mxu0 0.0
    %1006 = vmatprep.subr.mxu0 0.0
    %1007 = vmatpush1.msra.mxu0 0.0
    %1008 = vmatprep.subr.mxu0 0.0
    %1009 = vmatpush1.msra.mxu0 0.0
    %1010 = vmatprep.subr.mxu0 0.0
    %1011 = vmatpush1.msra.mxu0 0.0
    %1012 = vmatprep.mubr.f32.mxu0 0.0
    %1013 = vmatmul.mubr.f32.gmra.mrb[0].mxu0 %v734
    %v1014 = vpop.f32.mrb[0].mxu0
    %v1015 = vadd.f32 %v945, %v1014
    %v1016 = vpop.f32.mrb[0].mxu0
    %1017 = vdwg.mxu0
    %vm1018 = vcmp.le.f32.partialorder %v874, -0.5
    %vm1019 = vcmp.le.f32.partialorder %v876, -0.5
    %vm1020 = vcmp.le.f32.partialorder %v1015, -0.5
    %vm1021 = vcmp.ge.f32.partialorder %v874, 0.5
    %vm1022 = vcmp.ge.f32.partialorder %v876, 0.5
    %vm1023 = vcmp.ge.f32.partialorder %v1015, 0.5
    %v1024 = vmul.f32 %v874, -2.0
    %v1025 = vmul.f32 %v876, -2.0
    %v1026 = vmul.f32 %v1015, -2.0
    %v1027 = vmul.f32 %v1024, %v874
    %v1028 = vmul.f32 %v1025, %v876
    %v1029 = vmul.f32 %v1026, %v1015
    %v1030 = vmul.f32 %v1027, %v874
    %v1031 = vmul.f32 %v1028, %v876
    %v1032 = vmul.f32 %v1029, %v1015
    %v1033 = vmul.f32 %v874, 1.5
    %v1034 = vmul.f32 %v876, 1.5
    %v1035 = vmul.f32 %v1015, 1.5
    %v1036 = vadd.f32 %v1030, %v1033
    %v1037 = vadd.f32 %v1031, %v1034
    %v1038 = vadd.f32 %v1032, %v1035
    %v1039 = vadd.f32 %v1036, 0.5
    %v1040 = vadd.f32 %v1037, 0.5
    %v1041 = vadd.f32 %v1038, 0.5
    %v1042 = vsel %vm1021, 1.0, %v1039
    %v1043 = vsel %vm1022, 1.0, %v1040
    %v1044 = vsel %vm1023, 1.0, %v1041
    %v1045 = vsel %vm1018, 0.0, %v1042
    %v1046 = vsel %vm1019, 0.0, %v1043
    %v1047 = vsel %vm1020, 0.0, %v1044
    %v1048 = vld [vmem:[%s5] sm:$0x3]
    %v1049 = vld [vmem:[%s6] sm:$0xff]
    %v1050 = vld [vmem:[%s6 + $0x8] sm:$0xff]
    %v1051 = vld [vmem:[%s6 + $0x10] sm:$0xff]
    %v1052 = vld [vmem:[%s6 + $0x18] sm:$0xff]
    %v1053 = vld [vmem:[%s6 + $0x20] sm:$0xff]
    %v1054 = vld [vmem:[%s6 + $0x28] sm:$0xff]
    %v1055 = vld [vmem:[%s6 + $0x30] sm:$0xff]
    %v1056 = vld [vmem:[%s6 + $0x38] sm:$0xff]
    %v1057 = vld [vmem:[%s6 + $0x40] sm:$0xff]
    %v1058 = vld [vmem:[%s6 + $0x48] sm:$0xff]
    %v1059 = vld [vmem:[%s6 + $0x50] sm:$0xff]
    %v1060 = vld [vmem:[%s6 + $0x58] sm:$0xff]
    %v1061 = vld [vmem:[%s6 + $0x60] sm:$0xff]
    %v1062 = vld [vmem:[%s6 + $0x68] sm:$0xff]
    %v1063 = vld [vmem:[%s6 + $0x70] sm:$0xff]
    %v1064 = vld [vmem:[%s6 + $0x78] sm:$0xff]
    %v1065 = vld [vmem:[%s6 + $0x80] sm:$0xff]
    %v1066 = vld [vmem:[%s6 + $0x88] sm:$0xff]
    %v1067 = vld [vmem:[%s6 + $0x90] sm:$0xff]
    %v1068 = vld [vmem:[%s6 + $0x98] sm:$0xff]
    %v1069 = vld [vmem:[%s6 + $0xa0] sm:$0xff]
    %v1070 = vld [vmem:[%s6 + $0xa8] sm:$0xff]
    %v1071 = vld [vmem:[%s6 + $0xb0] sm:$0xff]
    %v1072 = vld [vmem:[%s6 + $0xb8] sm:$0xff]
    %v1073 = vld [vmem:[%s6 + $0xc0] sm:$0xff]
    %v1074 = vld [vmem:[%s6 + $0xc8] sm:$0xff]
    %v1075 = vld [vmem:[%s6 + $0xd0] sm:$0xff]
    %v1076 = vld [vmem:[%s6 + $0xd8] sm:$0xff]
    %v1077 = vld [vmem:[%s6 + $0xe0] sm:$0xff]
    %v1078 = vld [vmem:[%s6 + $0xe8] sm:$0xff]
    %v1079 = vld [vmem:[%s6 + $0xf0] sm:$0xff]
    %v1080 = vld [vmem:[%s6 + $0xf8] sm:$0xff]
    %v1081 = vld [vmem:[%s6 + $0x100] sm:$0xff]
    %v1082 = vld [vmem:[%s6 + $0x108] sm:$0xff]
    %v1083 = vld [vmem:[%s6 + $0x110] sm:$0xff]
    %v1084 = vld [vmem:[%s6 + $0x118] sm:$0xff]
    %v1085 = vld [vmem:[%s6 + $0x120] sm:$0xff]
    %v1086 = vld [vmem:[%s6 + $0x128] sm:$0xff]
    %v1087 = vld [vmem:[%s6 + $0x130] sm:$0xff]
    %v1088 = vld [vmem:[%s6 + $0x138] sm:$0xff]
    %v1089 = vld [vmem:[%s6 + $0x140] sm:$0xf]
    %v1090 = vld [vmem:[%s4] sm:$0xff]
    %v1091 = vld [vmem:[%s4 + $0x8] sm:$0xff]
    %v1092 = vld [vmem:[%s4 + $0x10] sm:$0xff]
    %v1093 = vmul.f32 %v1090, %v1045
    %v1094 = vmul.f32 %v1091, %v1046
    %v1095 = vmul.f32 %v1092, %v1047
    %vm1096 = vcmask 64512
    %v1098 = vsel %vm1096, %v1048, 0
    %1100 = vmatprep.subr.mxu0 %v1094
    %1101 = vmatpush1.msra.mxu0 %v1093
    %1102 = vmatprep.subr.mxu0 0.0
    %1103 = vmatpush1.msra.mxu0 0.0
    %1104 = vmatprep.subr.mxu0 0.0
    %1105 = vmatpush1.msra.mxu0 0.0
    %1106 = vmatprep.subr.mxu0 0.0
    %1107 = vmatpush1.msra.mxu0 0.0
    %1108 = vmatprep.subr.mxu0 0.0
    %1109 = vmatpush1.msra.mxu0 0.0
    %1110 = vmatprep.subr.mxu0 0.0
    %1111 = vmatpush1.msra.mxu0 0.0
    %1112 = vmatprep.subr.mxu0 0.0
    %1113 = vmatpush1.msra.mxu0 0.0
    %1114 = vmatprep.subr.mxu0 0.0
    %1115 = vmatpush1.msra.mxu0 0.0
    %1116 = vmatprep.subr.mxu0 0.0
    %1117 = vmatpush1.msra.mxu0 0.0
    %1118 = vmatprep.subr.mxu0 0.0
    %1119 = vmatpush1.msra.mxu0 0.0
    %1120 = vmatprep.subr.mxu0 0.0
    %1121 = vmatpush1.msra.mxu0 0.0
    %1122 = vmatprep.subr.mxu0 0.0
    %1123 = vmatpush1.msra.mxu0 0.0
    %1124 = vmatprep.subr.mxu0 0.0
    %1125 = vmatpush1.msra.mxu0 0.0
    %1126 = vmatprep.subr.mxu0 0.0
    %1127 = vmatpush1.msra.mxu0 0.0
    %1128 = vmatprep.subr.mxu0 0.0
    %1129 = vmatpush1.msra.mxu0 0.0
    %1130 = vmatprep.subr.mxu0 0.0
    %1131 = vmatpush1.msra.mxu0 0.0
    %1132 = vmatprep.subr.mxu0 0.0
    %1133 = vmatpush1.msra.mxu0 0.0
    %1134 = vmatprep.subr.mxu0 0.0
    %1135 = vmatpush1.msra.mxu0 0.0
    %1136 = vmatprep.subr.mxu0 0.0
    %1137 = vmatpush1.msra.mxu0 0.0
    %1138 = vmatprep.subr.mxu0 0.0
    %1139 = vmatpush1.msra.mxu0 0.0
    %1140 = vmatprep.subr.mxu0 0.0
    %1141 = vmatpush1.msra.mxu0 0.0
    %1142 = vmatprep.subr.mxu0 0.0
    %1143 = vmatpush1.msra.mxu0 0.0
    %1144 = vmatprep.subr.mxu0 0.0
    %1145 = vmatpush1.msra.mxu0 0.0
    %1146 = vmatprep.subr.mxu0 0.0
    %1147 = vmatpush1.msra.mxu0 0.0
    %1148 = vmatprep.subr.mxu0 0.0
    %1149 = vmatpush1.msra.mxu0 0.0
    %1150 = vmatprep.subr.mxu0 0.0
    %1151 = vmatpush1.msra.mxu0 0.0
    %1152 = vmatprep.subr.mxu0 0.0
    %1153 = vmatpush1.msra.mxu0 0.0
    %1154 = vmatprep.subr.mxu0 0.0
    %1155 = vmatpush1.msra.mxu0 0.0
    %1156 = vmatprep.subr.mxu0 0.0
    %1157 = vmatpush1.msra.mxu0 0.0
    %1158 = vmatprep.subr.mxu0 0.0
    %1159 = vmatpush1.msra.mxu0 0.0
    %1160 = vmatprep.subr.mxu0 0.0
    %1161 = vmatpush1.msra.mxu0 0.0
    %1162 = vmatprep.subr.mxu0 0.0
    %1163 = vmatpush1.msra.mxu0 0.0
    %1164 = vmatprep.mubr.f32.mxu0 0.0
    %1165 = vmatmul.mubr.f32.gmra.mrb[0].mxu0 %v1098
    %v1166 = vpop.f32.mrb[0].mxu0
    %v1167 = vadd.f32 0.0, %v1166
    %v1168 = vpop.f32.mrb[0].mxu0
    %v1169 = vadd.f32 0.0, %v1168
    %1170 = vdwg.mxu0
    %1171 = vmatprep.subr.mxu0 0.0
    %1172 = vmatpush1.msra.mxu0 %v1095
    %1173 = vmatprep.subr.mxu0 0.0
    %1174 = vmatpush1.msra.mxu0 0.0
    %1175 = vmatprep.subr.mxu0 0.0
    %1176 = vmatpush1.msra.mxu0 0.0
    %1177 = vmatprep.subr.mxu0 0.0
    %1178 = vmatpush1.msra.mxu0 0.0
    %1179 = vmatprep.subr.mxu0 0.0
    %1180 = vmatpush1.msra.mxu0 0.0
    %1181 = vmatprep.subr.mxu0 0.0
    %1182 = vmatpush1.msra.mxu0 0.0
    %1183 = vmatprep.subr.mxu0 0.0
    %1184 = vmatpush1.msra.mxu0 0.0
    %1185 = vmatprep.subr.mxu0 0.0
    %1186 = vmatpush1.msra.mxu0 0.0
    %1187 = vmatprep.subr.mxu0 0.0
    %1188 = vmatpush1.msra.mxu0 0.0
    %1189 = vmatprep.subr.mxu0 0.0
    %1190 = vmatpush1.msra.mxu0 0.0
    %1191 = vmatprep.subr.mxu0 0.0
    %1192 = vmatpush1.msra.mxu0 0.0
    %1193 = vmatprep.subr.mxu0 0.0
    %1194 = vmatpush1.msra.mxu0 0.0
    %1195 = vmatprep.subr.mxu0 0.0
    %1196 = vmatpush1.msra.mxu0 0.0
    %1197 = vmatprep.subr.mxu0 0.0
    %1198 = vmatpush1.msra.mxu0 0.0
    %1199 = vmatprep.subr.mxu0 0.0
    %1200 = vmatpush1.msra.mxu0 0.0
    %1201 = vmatprep.subr.mxu0 0.0
    %1202 = vmatpush1.msra.mxu0 0.0
    %1203 = vmatprep.subr.mxu0 0.0
    %1204 = vmatpush1.msra.mxu0 0.0
    %1205 = vmatprep.subr.mxu0 0.0
    %1206 = vmatpush1.msra.mxu0 0.0
    %1207 = vmatprep.subr.mxu0 0.0
    %1208 = vmatpush1.msra.mxu0 0.0
    %1209 = vmatprep.subr.mxu0 0.0
    %1210 = vmatpush1.msra.mxu0 0.0
    %1211 = vmatprep.subr.mxu0 0.0
    %1212 = vmatpush1.msra.mxu0 0.0
    %1213 = vmatprep.subr.mxu0 0.0
    %1214 = vmatpush1.msra.mxu0 0.0
    %1215 = vmatprep.subr.mxu0 0.0
    %1216 = vmatpush1.msra.mxu0 0.0
    %1217 = vmatprep.subr.mxu0 0.0
    %1218 = vmatpush1.msra.mxu0 0.0
    %1219 = vmatprep.subr.mxu0 0.0
    %1220 = vmatpush1.msra.mxu0 0.0
    %1221 = vmatprep.subr.mxu0 0.0
    %1222 = vmatpush1.msra.mxu0 0.0
    %1223 = vmatprep.subr.mxu0 0.0
    %1224 = vmatpush1.msra.mxu0 0.0
    %1225 = vmatprep.subr.mxu0 0.0
    %1226 = vmatpush1.msra.mxu0 0.0
    %1227 = vmatprep.subr.mxu0 0.0
    %1228 = vmatpush1.msra.mxu0 0.0
    %1229 = vmatprep.subr.mxu0 0.0
    %1230 = vmatpush1.msra.mxu0 0.0
    %1231 = vmatprep.subr.mxu0 0.0
    %1232 = vmatpush1.msra.mxu0 0.0
    %1233 = vmatprep.subr.mxu0 0.0
    %1234 = vmatpush1.msra.mxu0 0.0
    %1235 = vmatprep.mubr.f32.mxu0 0.0
    %1236 = vmatmul.mubr.f32.gmra.mrb[0].mxu0 %v1098
    %v1237 = vpop.f32.mrb[0].mxu0
    %v1238 = vadd.f32 0.0, %v1237
    %v1239 = vpop.f32.mrb[0].mxu0
    %1240 = vdwg.mxu0
    %vm1241 = vcmask 556032
    %v1243 = vsel %vm1241, %v1238, 0
    %vm1245 = vcmask 1043456
    %v1247 = vsel %vm1245, %v1089, 0
    %1249 = vmatprep.subr.mxu0 0.0
    %1250 = vmatpush1.msra.mxu0 %v1049
    %1251 = vmatprep.subr.mxu0 0.0
    %1252 = vmatpush1.msra.mxu0 %v1050
    %1253 = vmatprep.subr.mxu0 0.0
    %1254 = vmatpush1.msra.mxu0 %v1051
    %1255 = vmatprep.subr.mxu0 0.0
    %1256 = vmatpush1.msra.mxu0 %v1052
    %1257 = vmatprep.subr.mxu0 0.0
    %1258 = vmatpush1.msra.mxu0 %v1053
    %1259 = vmatprep.subr.mxu0 0.0
    %1260 = vmatpush1.msra.mxu0 %v1054
    %1261 = vmatprep.subr.mxu0 0.0
    %1262 = vmatpush1.msra.mxu0 %v1055
    %1263 = vmatprep.subr.mxu0 0.0
    %1264 = vmatpush1.msra.mxu0 %v1056
    %1265 = vmatprep.subr.mxu0 0.0
    %1266 = vmatpush1.msra.mxu0 %v1057
    %1267 = vmatprep.subr.mxu0 0.0
    %1268 = vmatpush1.msra.mxu0 %v1058
    %1269 = vmatprep.subr.mxu0 0.0
    %1270 = vmatpush1.msra.mxu0 %v1059
    %1271 = vmatprep.subr.mxu0 0.0
    %1272 = vmatpush1.msra.mxu0 %v1060
    %1273 = vmatprep.subr.mxu0 0.0
    %1274 = vmatpush1.msra.mxu0 %v1061
    %1275 = vmatprep.subr.mxu0 0.0
    %1276 = vmatpush1.msra.mxu0 %v1062
    %1277 = vmatprep.subr.mxu0 0.0
    %1278 = vmatpush1.msra.mxu0 %v1063
    %1279 = vmatprep.subr.mxu0 0.0
    %1280 = vmatpush1.msra.mxu0 %v1064
    %1281 = vmatprep.subr.mxu0 0.0
    %1282 = vmatpush1.msra.mxu0 %v1065
    %1283 = vmatprep.subr.mxu0 0.0
    %1284 = vmatpush1.msra.mxu0 %v1066
    %1285 = vmatprep.subr.mxu0 0.0
    %1286 = vmatpush1.msra.mxu0 %v1067
    %1287 = vmatprep.subr.mxu0 0.0
    %1288 = vmatpush1.msra.mxu0 %v1068
    %1289 = vmatprep.subr.mxu0 0.0
    %1290 = vmatpush1.msra.mxu0 %v1069
    %1291 = vmatprep.subr.mxu0 0.0
    %1292 = vmatpush1.msra.mxu0 %v1070
    %1293 = vmatprep.subr.mxu0 0.0
    %1294 = vmatpush1.msra.mxu0 %v1071
    %1295 = vmatprep.subr.mxu0 0.0
    %1296 = vmatpush1.msra.mxu0 %v1072
    %1297 = vmatprep.subr.mxu0 0.0
    %1298 = vmatpush1.msra.mxu0 %v1073
    %1299 = vmatprep.subr.mxu0 0.0
    %1300 = vmatpush1.msra.mxu0 %v1074
    %1301 = vmatprep.subr.mxu0 0.0
    %1302 = vmatpush1.msra.mxu0 %v1075
    %1303 = vmatprep.subr.mxu0 0.0
    %1304 = vmatpush1.msra.mxu0 %v1076
    %1305 = vmatprep.subr.mxu0 0.0
    %1306 = vmatpush1.msra.mxu0 %v1077
    %1307 = vmatprep.subr.mxu0 0.0
    %1308 = vmatpush1.msra.mxu0 %v1078
    %1309 = vmatprep.subr.mxu0 0.0
    %1310 = vmatpush1.msra.mxu0 %v1079
    %1311 = vmatprep.subr.mxu0 0.0
    %1312 = vmatpush1.msra.mxu0 %v1080
    %1313 = vmatprep.mubr.f32.mxu0 %v1169
    %1314 = vmatmul.mubr.f32.gmra.mrb[0].mxu0 %v1167
    %v1315 = vpop.f32.mrb[0].mxu0
    %v1316 = vadd.f32 0.0, %v1315
    %v1317 = vpop.f32.mrb[0].mxu0
    %1318 = vdwg.mxu0
    %1319 = vmatprep.subr.mxu0 0.0
    %1320 = vmatpush1.msra.mxu0 %v1081
    %1321 = vmatprep.subr.mxu0 0.0
    %1322 = vmatpush1.msra.mxu0 %v1082
    %1323 = vmatprep.subr.mxu0 0.0
    %1324 = vmatpush1.msra.mxu0 %v1083
    %1325 = vmatprep.subr.mxu0 0.0
    %1326 = vmatpush1.msra.mxu0 %v1084
    %1327 = vmatprep.subr.mxu0 0.0
    %1328 = vmatpush1.msra.mxu0 %v1085
    %1329 = vmatprep.subr.mxu0 0.0
    %1330 = vmatpush1.msra.mxu0 %v1086
    %1331 = vmatprep.subr.mxu0 0.0
    %1332 = vmatpush1.msra.mxu0 %v1087
    %1333 = vmatprep.subr.mxu0 0.0
    %1334 = vmatpush1.msra.mxu0 %v1088
    %1335 = vmatprep.subr.mxu0 0.0
    %1336 = vmatpush1.msra.mxu0 %v1247
    %1337 = vmatprep.subr.mxu0 0.0
    %1338 = vmatpush1.msra.mxu0 0.0
    %1339 = vmatprep.subr.mxu0 0.0
    %1340 = vmatpush1.msra.mxu0 0.0
    %1341 = vmatprep.subr.mxu0 0.0
    %1342 = vmatpush1.msra.mxu0 0.0
    %1343 = vmatprep.subr.mxu0 0.0
    %1344 = vmatpush1.msra.mxu0 0.0
    %1345 = vmatprep.subr.mxu0 0.0
    %1346 = vmatpush1.msra.mxu0 0.0
    %1347 = vmatprep.subr.mxu0 0.0
    %1348 = vmatpush1.msra.mxu0 0.0
    %1349 = vmatprep.subr.mxu0 0.0
    %1350 = vmatpush1.msra.mxu0 0.0
    %1351 = vmatprep.subr.mxu0 0.0
    %1352 = vmatpush1.msra.mxu0 0.0
    %1353 = vmatprep.subr.mxu0 0.0
    %1354 = vmatpush1.msra.mxu0 0.0
    %1355 = vmatprep.subr.mxu0 0.0
    %1356 = vmatpush1.msra.mxu0 0.0
    %1357 = vmatprep.subr.mxu0 0.0
    %1358 = vmatpush1.msra.mxu0 0.0
    %1359 = vmatprep.subr.mxu0 0.0
    %1360 = vmatpush1.msra.mxu0 0.0
    %1361 = vmatprep.subr.mxu0 0.0
    %1362 = vmatpush1.msra.mxu0 0.0
    %1363 = vmatprep.subr.mxu0 0.0
    %1364 = vmatpush1.msra.mxu0 0.0
    %1365 = vmatprep.subr.mxu0 0.0
    %1366 = vmatpush1.msra.mxu0 0.0
    %1367 = vmatprep.subr.mxu0 0.0
    %1368 = vmatpush1.msra.mxu0 0.0
    %1369 = vmatprep.subr.mxu0 0.0
    %1370 = vmatpush1.msra.mxu0 0.0
    %1371 = vmatprep.subr.mxu0 0.0
    %1372 = vmatpush1.msra.mxu0 0.0
    %1373 = vmatprep.subr.mxu0 0.0
    %1374 = vmatpush1.msra.mxu0 0.0
    %1375 = vmatprep.subr.mxu0 0.0
    %1376 = vmatpush1.msra.mxu0 0.0
    %1377 = vmatprep.subr.mxu0 0.0
    %1378 = vmatpush1.msra.mxu0 0.0
    %1379 = vmatprep.subr.mxu0 0.0
    %1380 = vmatpush1.msra.mxu0 0.0
    %1381 = vmatprep.subr.mxu0 0.0
    %1382 = vmatpush1.msra.mxu0 0.0
    %1383 = vmatprep.mubr.f32.mxu0 0.0
    %1384 = vmatmul.mubr.f32.gmra.mrb[0].mxu0 %v1243
    %v1385 = vpop.f32.mrb[0].mxu0
    %v1386 = vadd.f32 %v1316, %v1385
    %v1387 = vpop.f32.mrb[0].mxu0
    %1388 = vdwg.mxu0
    %vm1389 = vcmask 287744
    %1390 = vst.msk [vmem:[#allocation7] sm:$0x3] %vm1389, %v1386
    %s1391 = scalar_lea.vmem %s4, 24
    %v1392 = vld [vmem:[%s1391] sm:$0xff]
    %v1393 = vld [vmem:[%s1391 + $0x8] sm:$0xff]
    %v1394 = vld [vmem:[%s1391 + $0x10] sm:$0xff]
    %v1395 = vmul.f32 %v1392, %v1045
    %v1396 = vmul.f32 %v1393, %v1046
    %v1397 = vmul.f32 %v1394, %v1047
    %1398 = vmatprep.subr.mxu0 %v1396
    %1399 = vmatpush1.msra.mxu0 %v1395
    %1400 = vmatprep.subr.mxu0 0.0
    %1401 = vmatpush1.msra.mxu0 0.0
    %1402 = vmatprep.subr.mxu0 0.0
    %1403 = vmatpush1.msra.mxu0 0.0
    %1404 = vmatprep.subr.mxu0 0.0
    %1405 = vmatpush1.msra.mxu0 0.0
    %1406 = vmatprep.subr.mxu0 0.0
    %1407 = vmatpush1.msra.mxu0 0.0
    %1408 = vmatprep.subr.mxu0 0.0
    %1409 = vmatpush1.msra.mxu0 0.0
    %1410 = vmatprep.subr.mxu0 0.0
    %1411 = vmatpush1.msra.mxu0 0.0
    %1412 = vmatprep.subr.mxu0 0.0
    %1413 = vmatpush1.msra.mxu0 0.0
    %1414 = vmatprep.subr.mxu0 0.0
    %1415 = vmatpush1.msra.mxu0 0.0
    %1416 = vmatprep.subr.mxu0 0.0
    %1417 = vmatpush1.msra.mxu0 0.0
    %1418 = vmatprep.subr.mxu0 0.0
    %1419 = vmatpush1.msra.mxu0 0.0
    %1420 = vmatprep.subr.mxu0 0.0
    %1421 = vmatpush1.msra.mxu0 0.0
    %1422 = vmatprep.subr.mxu0 0.0
    %1423 = vmatpush1.msra.mxu0 0.0
    %1424 = vmatprep.subr.mxu0 0.0
    %1425 = vmatpush1.msra.mxu0 0.0
    %1426 = vmatprep.subr.mxu0 0.0
    %1427 = vmatpush1.msra.mxu0 0.0
    %1428 = vmatprep.subr.mxu0 0.0
    %1429 = vmatpush1.msra.mxu0 0.0
    %1430 = vmatprep.subr.mxu0 0.0
    %1431 = vmatpush1.msra.mxu0 0.0
    %1432 = vmatprep.subr.mxu0 0.0
    %1433 = vmatpush1.msra.mxu0 0.0
    %1434 = vmatprep.subr.mxu0 0.0
    %1435 = vmatpush1.msra.mxu0 0.0
    %1436 = vmatprep.subr.mxu0 0.0
    %1437 = vmatpush1.msra.mxu0 0.0
    %1438 = vmatprep.subr.mxu0 0.0
    %1439 = vmatpush1.msra.mxu0 0.0
    %1440 = vmatprep.subr.mxu0 0.0
    %1441 = vmatpush1.msra.mxu0 0.0
    %1442 = vmatprep.subr.mxu0 0.0
    %1443 = vmatpush1.msra.mxu0 0.0
    %1444 = vmatprep.subr.mxu0 0.0
    %1445 = vmatpush1.msra.mxu0 0.0
    %1446 = vmatprep.subr.mxu0 0.0
    %1447 = vmatpush1.msra.mxu0 0.0
    %1448 = vmatprep.subr.mxu0 0.0
    %1449 = vmatpush1.msra.mxu0 0.0
    %1450 = vmatprep.subr.mxu0 0.0
    %1451 = vmatpush1.msra.mxu0 0.0
    %1452 = vmatprep.subr.mxu0 0.0
    %1453 = vmatpush1.msra.mxu0 0.0
    %1454 = vmatprep.subr.mxu0 0.0
    %1455 = vmatpush1.msra.mxu0 0.0
    %1456 = vmatprep.subr.mxu0 0.0
    %1457 = vmatpush1.msra.mxu0 0.0
    %1458 = vmatprep.subr.mxu0 0.0
    %1459 = vmatpush1.msra.mxu0 0.0
    %1460 = vmatprep.subr.mxu0 0.0
    %1461 = vmatpush1.msra.mxu0 0.0
    %1462 = vmatprep.mubr.f32.mxu0 0.0
    %1463 = vmatmul.mubr.f32.gmra.mrb[0].mxu0 %v1098
    %v1464 = vpop.f32.mrb[0].mxu0
    %v1465 = vadd.f32 0.0, %v1464
    %v1466 = vpop.f32.mrb[0].mxu0
    %v1467 = vadd.f32 0.0, %v1466
    %1468 = vdwg.mxu0
    %1469 = vmatprep.subr.mxu0 0.0
    %1470 = vmatpush1.msra.mxu0 %v1397
    %1471 = vmatprep.subr.mxu0 0.0
    %1472 = vmatpush1.msra.mxu0 0.0
    %1473 = vmatprep.subr.mxu0 0.0
    %1474 = vmatpush1.msra.mxu0 0.0
    %1475 = vmatprep.subr.mxu0 0.0
    %1476 = vmatpush1.msra.mxu0 0.0
    %1477 = vmatprep.subr.mxu0 0.0
    %1478 = vmatpush1.msra.mxu0 0.0
    %1479 = vmatprep.subr.mxu0 0.0
    %1480 = vmatpush1.msra.mxu0 0.0
    %1481 = vmatprep.subr.mxu0 0.0
    %1482 = vmatpush1.msra.mxu0 0.0
    %1483 = vmatprep.subr.mxu0 0.0
    %1484 = vmatpush1.msra.mxu0 0.0
    %1485 = vmatprep.subr.mxu0 0.0
    %1486 = vmatpush1.msra.mxu0 0.0
    %1487 = vmatprep.subr.mxu0 0.0
    %1488 = vmatpush1.msra.mxu0 0.0
    %1489 = vmatprep.subr.mxu0 0.0
    %1490 = vmatpush1.msra.mxu0 0.0
    %1491 = vmatprep.subr.mxu0 0.0
    %1492 = vmatpush1.msra.mxu0 0.0
    %1493 = vmatprep.subr.mxu0 0.0
    %1494 = vmatpush1.msra.mxu0 0.0
    %1495 = vmatprep.subr.mxu0 0.0
    %1496 = vmatpush1.msra.mxu0 0.0
    %1497 = vmatprep.subr.mxu0 0.0
    %1498 = vmatpush1.msra.mxu0 0.0
    %1499 = vmatprep.subr.mxu0 0.0
    %1500 = vmatpush1.msra.mxu0 0.0
    %1501 = vmatprep.subr.mxu0 0.0
    %1502 = vmatpush1.msra.mxu0 0.0
    %1503 = vmatprep.subr.mxu0 0.0
    %1504 = vmatpush1.msra.mxu0 0.0
    %1505 = vmatprep.subr.mxu0 0.0
    %1506 = vmatpush1.msra.mxu0 0.0
    %1507 = vmatprep.subr.mxu0 0.0
    %1508 = vmatpush1.msra.mxu0 0.0
    %1509 = vmatprep.subr.mxu0 0.0
    %1510 = vmatpush1.msra.mxu0 0.0
    %1511 = vmatprep.subr.mxu0 0.0
    %1512 = vmatpush1.msra.mxu0 0.0
    %1513 = vmatprep.subr.mxu0 0.0
    %1514 = vmatpush1.msra.mxu0 0.0
    %1515 = vmatprep.subr.mxu0 0.0
    %1516 = vmatpush1.msra.mxu0 0.0
    %1517 = vmatprep.subr.mxu0 0.0
    %1518 = vmatpush1.msra.mxu0 0.0
    %1519 = vmatprep.subr.mxu0 0.0
    %1520 = vmatpush1.msra.mxu0 0.0
    %1521 = vmatprep.subr.mxu0 0.0
    %1522 = vmatpush1.msra.mxu0 0.0
    %1523 = vmatprep.subr.mxu0 0.0
    %1524 = vmatpush1.msra.mxu0 0.0
    %1525 = vmatprep.subr.mxu0 0.0
    %1526 = vmatpush1.msra.mxu0 0.0
    %1527 = vmatprep.subr.mxu0 0.0
    %1528 = vmatpush1.msra.mxu0 0.0
    %1529 = vmatprep.subr.mxu0 0.0
    %1530 = vmatpush1.msra.mxu0 0.0
    %1531 = vmatprep.subr.mxu0 0.0
    %1532 = vmatpush1.msra.mxu0 0.0
    %1533 = vmatprep.mubr.f32.mxu0 0.0
    %1534 = vmatmul.mubr.f32.gmra.mrb[0].mxu0 %v1098
    %v1535 = vpop.f32.mrb[0].mxu0
    %v1536 = vadd.f32 0.0, %v1535
    %v1537 = vpop.f32.mrb[0].mxu0
    %1538 = vdwg.mxu0
    %v1540 = vsel %vm1241, %v1536, 0
    %1542 = vmatprep.subr.mxu0 0.0
    %1543 = vmatpush1.msra.mxu0 %v1049
    %1544 = vmatprep.subr.mxu0 0.0
    %1545 = vmatpush1.msra.mxu0 %v1050
    %1546 = vmatprep.subr.mxu0 0.0
    %1547 = vmatpush1.msra.mxu0 %v1051
    %1548 = vmatprep.subr.mxu0 0.0
    %1549 = vmatpush1.msra.mxu0 %v1052
    %1550 = vmatprep.subr.mxu0 0.0
    %1551 = vmatpush1.msra.mxu0 %v1053
    %1552 = vmatprep.subr.mxu0 0.0
    %1553 = vmatpush1.msra.mxu0 %v1054
    %1554 = vmatprep.subr.mxu0 0.0
    %1555 = vmatpush1.msra.mxu0 %v1055
    %1556 = vmatprep.subr.mxu0 0.0
    %1557 = vmatpush1.msra.mxu0 %v1056
    %1558 = vmatprep.subr.mxu0 0.0
    %1559 = vmatpush1.msra.mxu0 %v1057
    %1560 = vmatprep.subr.mxu0 0.0
    %1561 = vmatpush1.msra.mxu0 %v1058
    %1562 = vmatprep.subr.mxu0 0.0
    %1563 = vmatpush1.msra.mxu0 %v1059
    %1564 = vmatprep.subr.mxu0 0.0
    %1565 = vmatpush1.msra.mxu0 %v1060
    %1566 = vmatprep.subr.mxu0 0.0
    %1567 = vmatpush1.msra.mxu0 %v1061
    %1568 = vmatprep.subr.mxu0 0.0
    %1569 = vmatpush1.msra.mxu0 %v1062
    %1570 = vmatprep.subr.mxu0 0.0
    %1571 = vmatpush1.msra.mxu0 %v1063
    %1572 = vmatprep.subr.mxu0 0.0
    %1573 = vmatpush1.msra.mxu0 %v1064
    %1574 = vmatprep.subr.mxu0 0.0
    %1575 = vmatpush1.msra.mxu0 %v1065
    %1576 = vmatprep.subr.mxu0 0.0
    %1577 = vmatpush1.msra.mxu0 %v1066
    %1578 = vmatprep.subr.mxu0 0.0
    %1579 = vmatpush1.msra.mxu0 %v1067
    %1580 = vmatprep.subr.mxu0 0.0
    %1581 = vmatpush1.msra.mxu0 %v1068
    %1582 = vmatprep.subr.mxu0 0.0
    %1583 = vmatpush1.msra.mxu0 %v1069
    %1584 = vmatprep.subr.mxu0 0.0
    %1585 = vmatpush1.msra.mxu0 %v1070
    %1586 = vmatprep.subr.mxu0 0.0
    %1587 = vmatpush1.msra.mxu0 %v1071
    %1588 = vmatprep.subr.mxu0 0.0
    %1589 = vmatpush1.msra.mxu0 %v1072
    %1590 = vmatprep.subr.mxu0 0.0
    %1591 = vmatpush1.msra.mxu0 %v1073
    %1592 = vmatprep.subr.mxu0 0.0
    %1593 = vmatpush1.msra.mxu0 %v1074
    %1594 = vmatprep.subr.mxu0 0.0
    %1595 = vmatpush1.msra.mxu0 %v1075
    %1596 = vmatprep.subr.mxu0 0.0
    %1597 = vmatpush1.msra.mxu0 %v1076
    %1598 = vmatprep.subr.mxu0 0.0
    %1599 = vmatpush1.msra.mxu0 %v1077
    %1600 = vmatprep.subr.mxu0 0.0
    %1601 = vmatpush1.msra.mxu0 %v1078
    %1602 = vmatprep.subr.mxu0 0.0
    %1603 = vmatpush1.msra.mxu0 %v1079
    %1604 = vmatprep.subr.mxu0 0.0
    %1605 = vmatpush1.msra.mxu0 %v1080
    %1606 = vmatprep.mubr.f32.mxu0 %v1467
    %1607 = vmatmul.mubr.f32.gmra.mrb[0].mxu0 %v1465
    %v1608 = vpop.f32.mrb[0].mxu0
    %v1609 = vadd.f32 0.0, %v1608
    %v1610 = vpop.f32.mrb[0].mxu0
    %1611 = vdwg.mxu0
    %1612 = vmatprep.subr.mxu0 0.0
    %1613 = vmatpush1.msra.mxu0 %v1081
    %1614 = vmatprep.subr.mxu0 0.0
    %1615 = vmatpush1.msra.mxu0 %v1082
    %1616 = vmatprep.subr.mxu0 0.0
    %1617 = vmatpush1.msra.mxu0 %v1083
    %1618 = vmatprep.subr.mxu0 0.0
    %1619 = vmatpush1.msra.mxu0 %v1084
    %1620 = vmatprep.subr.mxu0 0.0
    %1621 = vmatpush1.msra.mxu0 %v1085
    %1622 = vmatprep.subr.mxu0 0.0
    %1623 = vmatpush1.msra.mxu0 %v1086
    %1624 = vmatprep.subr.mxu0 0.0
    %1625 = vmatpush1.msra.mxu0 %v1087
    %1626 = vmatprep.subr.mxu0 0.0
    %1627 = vmatpush1.msra.mxu0 %v1088
    %1628 = vmatprep.subr.mxu0 0.0
    %1629 = vmatpush1.msra.mxu0 %v1247
    %1630 = vmatprep.subr.mxu0 0.0
    %1631 = vmatpush1.msra.mxu0 0.0
    %1632 = vmatprep.subr.mxu0 0.0
    %1633 = vmatpush1.msra.mxu0 0.0
    %1634 = vmatprep.subr.mxu0 0.0
    %1635 = vmatpush1.msra.mxu0 0.0
    %1636 = vmatprep.subr.mxu0 0.0
    %1637 = vmatpush1.msra.mxu0 0.0
    %1638 = vmatprep.subr.mxu0 0.0
    %1639 = vmatpush1.msra.mxu0 0.0
    %1640 = vmatprep.subr.mxu0 0.0
    %1641 = vmatpush1.msra.mxu0 0.0
    %1642 = vmatprep.subr.mxu0 0.0
    %1643 = vmatpush1.msra.mxu0 0.0
    %1644 = vmatprep.subr.mxu0 0.0
    %1645 = vmatpush1.msra.mxu0 0.0
    %1646 = vmatprep.subr.mxu0 0.0
    %1647 = vmatpush1.msra.mxu0 0.0
    %1648 = vmatprep.subr.mxu0 0.0
    %1649 = vmatpush1.msra.mxu0 0.0
    %1650 = vmatprep.subr.mxu0 0.0
    %1651 = vmatpush1.msra.mxu0 0.0
    %1652 = vmatprep.subr.mxu0 0.0
    %1653 = vmatpush1.msra.mxu0 0.0
    %1654 = vmatprep.subr.mxu0 0.0
    %1655 = vmatpush1.msra.mxu0 0.0
    %1656 = vmatprep.subr.mxu0 0.0
    %1657 = vmatpush1.msra.mxu0 0.0
    %1658 = vmatprep.subr.mxu0 0.0
    %1659 = vmatpush1.msra.mxu0 0.0
    %1660 = vmatprep.subr.mxu0 0.0
    %1661 = vmatpush1.msra.mxu0 0.0
    %1662 = vmatprep.subr.mxu0 0.0
    %1663 = vmatpush1.msra.mxu0 0.0
    %1664 = vmatprep.subr.mxu0 0.0
    %1665 = vmatpush1.msra.mxu0 0.0
    %1666 = vmatprep.subr.mxu0 0.0
    %1667 = vmatpush1.msra.mxu0 0.0
    %1668 = vmatprep.subr.mxu0 0.0
    %1669 = vmatpush1.msra.mxu0 0.0
    %1670 = vmatprep.subr.mxu0 0.0
    %1671 = vmatpush1.msra.mxu0 0.0
    %1672 = vmatprep.subr.mxu0 0.0
    %1673 = vmatpush1.msra.mxu0 0.0
    %1674 = vmatprep.subr.mxu0 0.0
    %1675 = vmatpush1.msra.mxu0 0.0
    %1676 = vmatprep.mubr.f32.mxu0 0.0
    %1677 = vmatmul.mubr.f32.gmra.mrb[0].mxu0 %v1540
    %v1678 = vpop.f32.mrb[0].mxu0
    %v1679 = vadd.f32 %v1609, %v1678
    %v1680 = vpop.f32.mrb[0].mxu0
    %1681 = vdwg.mxu0
    %s1682 = scalar_lea.vmem [#allocation7], 2
    %1683 = vst.msk [vmem:[%s1682] sm:$0x3] %vm1389, %v1679
    %s1684 = scalar_lea.vmem %s4, 48
    %v1685 = vld [vmem:[%s1684] sm:$0xff]
    %v1686 = vld [vmem:[%s1684 + $0x8] sm:$0xff]
    %v1687 = vld [vmem:[%s1684 + $0x10] sm:$0xff]
    %v1688 = vmul.f32 %v1685, %v1045
    %v1689 = vmul.f32 %v1686, %v1046
    %v1690 = vmul.f32 %v1687, %v1047
    %1691 = vmatprep.subr.mxu0 %v1689
    %1692 = vmatpush1.msra.mxu0 %v1688
    %1693 = vmatprep.subr.mxu0 0.0
    %1694 = vmatpush1.msra.mxu0 0.0
    %1695 = vmatprep.subr.mxu0 0.0
    %1696 = vmatpush1.msra.mxu0 0.0
    %1697 = vmatprep.subr.mxu0 0.0
    %1698 = vmatpush1.msra.mxu0 0.0
    %1699 = vmatprep.subr.mxu0 0.0
    %1700 = vmatpush1.msra.mxu0 0.0
    %1701 = vmatprep.subr.mxu0 0.0
    %1702 = vmatpush1.msra.mxu0 0.0
    %1703 = vmatprep.subr.mxu0 0.0
    %1704 = vmatpush1.msra.mxu0 0.0
    %1705 = vmatprep.subr.mxu0 0.0
    %1706 = vmatpush1.msra.mxu0 0.0
    %1707 = vmatprep.subr.mxu0 0.0
    %1708 = vmatpush1.msra.mxu0 0.0
    %1709 = vmatprep.subr.mxu0 0.0
    %1710 = vmatpush1.msra.mxu0 0.0
    %1711 = vmatprep.subr.mxu0 0.0
    %1712 = vmatpush1.msra.mxu0 0.0
    %1713 = vmatprep.subr.mxu0 0.0
    %1714 = vmatpush1.msra.mxu0 0.0
    %1715 = vmatprep.subr.mxu0 0.0
    %1716 = vmatpush1.msra.mxu0 0.0
    %1717 = vmatprep.subr.mxu0 0.0
    %1718 = vmatpush1.msra.mxu0 0.0
    %1719 = vmatprep.subr.mxu0 0.0
    %1720 = vmatpush1.msra.mxu0 0.0
    %1721 = vmatprep.subr.mxu0 0.0
    %1722 = vmatpush1.msra.mxu0 0.0
    %1723 = vmatprep.subr.mxu0 0.0
    %1724 = vmatpush1.msra.mxu0 0.0
    %1725 = vmatprep.subr.mxu0 0.0
    %1726 = vmatpush1.msra.mxu0 0.0
    %1727 = vmatprep.subr.mxu0 0.0
    %1728 = vmatpush1.msra.mxu0 0.0
    %1729 = vmatprep.subr.mxu0 0.0
    %1730 = vmatpush1.msra.mxu0 0.0
    %1731 = vmatprep.subr.mxu0 0.0
    %1732 = vmatpush1.msra.mxu0 0.0
    %1733 = vmatprep.subr.mxu0 0.0
    %1734 = vmatpush1.msra.mxu0 0.0
    %1735 = vmatprep.subr.mxu0 0.0
    %1736 = vmatpush1.msra.mxu0 0.0
    %1737 = vmatprep.subr.mxu0 0.0
    %1738 = vmatpush1.msra.mxu0 0.0
    %1739 = vmatprep.subr.mxu0 0.0
    %1740 = vmatpush1.msra.mxu0 0.0
    %1741 = vmatprep.subr.mxu0 0.0
    %1742 = vmatpush1.msra.mxu0 0.0
    %1743 = vmatprep.subr.mxu0 0.0
    %1744 = vmatpush1.msra.mxu0 0.0
    %1745 = vmatprep.subr.mxu0 0.0
    %1746 = vmatpush1.msra.mxu0 0.0
    %1747 = vmatprep.subr.mxu0 0.0
    %1748 = vmatpush1.msra.mxu0 0.0
    %1749 = vmatprep.subr.mxu0 0.0
    %1750 = vmatpush1.msra.mxu0 0.0
    %1751 = vmatprep.subr.mxu0 0.0
    %1752 = vmatpush1.msra.mxu0 0.0
    %1753 = vmatprep.subr.mxu0 0.0
    %1754 = vmatpush1.msra.mxu0 0.0
    %1755 = vmatprep.mubr.f32.mxu0 0.0
    %1756 = vmatmul.mubr.f32.gmra.mrb[0].mxu0 %v1098
    %v1757 = vpop.f32.mrb[0].mxu0
    %v1758 = vadd.f32 0.0, %v1757
    %v1759 = vpop.f32.mrb[0].mxu0
    %v1760 = vadd.f32 0.0, %v1759
    %1761 = vdwg.mxu0
    %1762 = vmatprep.subr.mxu0 0.0
    %1763 = vmatpush1.msra.mxu0 %v1690
    %1764 = vmatprep.subr.mxu0 0.0
    %1765 = vmatpush1.msra.mxu0 0.0
    %1766 = vmatprep.subr.mxu0 0.0
    %1767 = vmatpush1.msra.mxu0 0.0
    %1768 = vmatprep.subr.mxu0 0.0
    %1769 = vmatpush1.msra.mxu0 0.0
    %1770 = vmatprep.subr.mxu0 0.0
    %1771 = vmatpush1.msra.mxu0 0.0
    %1772 = vmatprep.subr.mxu0 0.0
    %1773 = vmatpush1.msra.mxu0 0.0
    %1774 = vmatprep.subr.mxu0 0.0
    %1775 = vmatpush1.msra.mxu0 0.0
    %1776 = vmatprep.subr.mxu0 0.0
    %1777 = vmatpush1.msra.mxu0 0.0
    %1778 = vmatprep.subr.mxu0 0.0
    %1779 = vmatpush1.msra.mxu0 0.0
    %1780 = vmatprep.subr.mxu0 0.0
    %1781 = vmatpush1.msra.mxu0 0.0
    %1782 = vmatprep.subr.mxu0 0.0
    %1783 = vmatpush1.msra.mxu0 0.0
    %1784 = vmatprep.subr.mxu0 0.0
    %1785 = vmatpush1.msra.mxu0 0.0
    %1786 = vmatprep.subr.mxu0 0.0
    %1787 = vmatpush1.msra.mxu0 0.0
    %1788 = vmatprep.subr.mxu0 0.0
    %1789 = vmatpush1.msra.mxu0 0.0
    %1790 = vmatprep.subr.mxu0 0.0
    %1791 = vmatpush1.msra.mxu0 0.0
    %1792 = vmatprep.subr.mxu0 0.0
    %1793 = vmatpush1.msra.mxu0 0.0
    %1794 = vmatprep.subr.mxu0 0.0
    %1795 = vmatpush1.msra.mxu0 0.0
    %1796 = vmatprep.subr.mxu0 0.0
    %1797 = vmatpush1.msra.mxu0 0.0
    %1798 = vmatprep.subr.mxu0 0.0
    %1799 = vmatpush1.msra.mxu0 0.0
    %1800 = vmatprep.subr.mxu0 0.0
    %1801 = vmatpush1.msra.mxu0 0.0
    %1802 = vmatprep.subr.mxu0 0.0
    %1803 = vmatpush1.msra.mxu0 0.0
    %1804 = vmatprep.subr.mxu0 0.0
    %1805 = vmatpush1.msra.mxu0 0.0
    %1806 = vmatprep.subr.mxu0 0.0
    %1807 = vmatpush1.msra.mxu0 0.0
    %1808 = vmatprep.subr.mxu0 0.0
    %1809 = vmatpush1.msra.mxu0 0.0
    %1810 = vmatprep.subr.mxu0 0.0
    %1811 = vmatpush1.msra.mxu0 0.0
    %1812 = vmatprep.subr.mxu0 0.0
    %1813 = vmatpush1.msra.mxu0 0.0
    %1814 = vmatprep.subr.mxu0 0.0
    %1815 = vmatpush1.msra.mxu0 0.0
    %1816 = vmatprep.subr.mxu0 0.0
    %1817 = vmatpush1.msra.mxu0 0.0
    %1818 = vmatprep.subr.mxu0 0.0
    %1819 = vmatpush1.msra.mxu0 0.0
    %1820 = vmatprep.subr.mxu0 0.0
    %1821 = vmatpush1.msra.mxu0 0.0
    %1822 = vmatprep.subr.mxu0 0.0
    %1823 = vmatpush1.msra.mxu0 0.0
    %1824 = vmatprep.subr.mxu0 0.0
    %1825 = vmatpush1.msra.mxu0 0.0
    %1826 = vmatprep.mubr.f32.mxu0 0.0
    %1827 = vmatmul.mubr.f32.gmra.mrb[0].mxu0 %v1098
    %v1828 = vpop.f32.mrb[0].mxu0
    %v1829 = vadd.f32 0.0, %v1828
    %v1830 = vpop.f32.mrb[0].mxu0
    %1831 = vdwg.mxu0
    %v1833 = vsel %vm1241, %v1829, 0
    %1835 = vmatprep.subr.mxu0 0.0
    %1836 = vmatpush1.msra.mxu0 %v1049
    %1837 = vmatprep.subr.mxu0 0.0
    %1838 = vmatpush1.msra.mxu0 %v1050
    %1839 = vmatprep.subr.mxu0 0.0
    %1840 = vmatpush1.msra.mxu0 %v1051
    %1841 = vmatprep.subr.mxu0 0.0
    %1842 = vmatpush1.msra.mxu0 %v1052
    %1843 = vmatprep.subr.mxu0 0.0
    %1844 = vmatpush1.msra.mxu0 %v1053
    %1845 = vmatprep.subr.mxu0 0.0
    %1846 = vmatpush1.msra.mxu0 %v1054
    %1847 = vmatprep.subr.mxu0 0.0
    %1848 = vmatpush1.msra.mxu0 %v1055
    %1849 = vmatprep.subr.mxu0 0.0
    %1850 = vmatpush1.msra.mxu0 %v1056
    %1851 = vmatprep.subr.mxu0 0.0
    %1852 = vmatpush1.msra.mxu0 %v1057
    %1853 = vmatprep.subr.mxu0 0.0
    %1854 = vmatpush1.msra.mxu0 %v1058
    %1855 = vmatprep.subr.mxu0 0.0
    %1856 = vmatpush1.msra.mxu0 %v1059
    %1857 = vmatprep.subr.mxu0 0.0
    %1858 = vmatpush1.msra.mxu0 %v1060
    %1859 = vmatprep.subr.mxu0 0.0
    %1860 = vmatpush1.msra.mxu0 %v1061
    %1861 = vmatprep.subr.mxu0 0.0
    %1862 = vmatpush1.msra.mxu0 %v1062
    %1863 = vmatprep.subr.mxu0 0.0
    %1864 = vmatpush1.msra.mxu0 %v1063
    %1865 = vmatprep.subr.mxu0 0.0
    %1866 = vmatpush1.msra.mxu0 %v1064
    %1867 = vmatprep.subr.mxu0 0.0
    %1868 = vmatpush1.msra.mxu0 %v1065
    %1869 = vmatprep.subr.mxu0 0.0
    %1870 = vmatpush1.msra.mxu0 %v1066
    %1871 = vmatprep.subr.mxu0 0.0
    %1872 = vmatpush1.msra.mxu0 %v1067
    %1873 = vmatprep.subr.mxu0 0.0
    %1874 = vmatpush1.msra.mxu0 %v1068
    %1875 = vmatprep.subr.mxu0 0.0
    %1876 = vmatpush1.msra.mxu0 %v1069
    %1877 = vmatprep.subr.mxu0 0.0
    %1878 = vmatpush1.msra.mxu0 %v1070
    %1879 = vmatprep.subr.mxu0 0.0
    %1880 = vmatpush1.msra.mxu0 %v1071
    %1881 = vmatprep.subr.mxu0 0.0
    %1882 = vmatpush1.msra.mxu0 %v1072
    %1883 = vmatprep.subr.mxu0 0.0
    %1884 = vmatpush1.msra.mxu0 %v1073
    %1885 = vmatprep.subr.mxu0 0.0
    %1886 = vmatpush1.msra.mxu0 %v1074
    %1887 = vmatprep.subr.mxu0 0.0
    %1888 = vmatpush1.msra.mxu0 %v1075
    %1889 = vmatprep.subr.mxu0 0.0
    %1890 = vmatpush1.msra.mxu0 %v1076
    %1891 = vmatprep.subr.mxu0 0.0
    %1892 = vmatpush1.msra.mxu0 %v1077
    %1893 = vmatprep.subr.mxu0 0.0
    %1894 = vmatpush1.msra.mxu0 %v1078
    %1895 = vmatprep.subr.mxu0 0.0
    %1896 = vmatpush1.msra.mxu0 %v1079
    %1897 = vmatprep.subr.mxu0 0.0
    %1898 = vmatpush1.msra.mxu0 %v1080
    %1899 = vmatprep.mubr.f32.mxu0 %v1760
    %1900 = vmatmul.mubr.f32.gmra.mrb[0].mxu0 %v1758
    %v1901 = vpop.f32.mrb[0].mxu0
    %v1902 = vadd.f32 0.0, %v1901
    %v1903 = vpop.f32.mrb[0].mxu0
    %1904 = vdwg.mxu0
    %1905 = vmatprep.subr.mxu0 0.0
    %1906 = vmatpush1.msra.mxu0 %v1081
    %1907 = vmatprep.subr.mxu0 0.0
    %1908 = vmatpush1.msra.mxu0 %v1082
    %1909 = vmatprep.subr.mxu0 0.0
    %1910 = vmatpush1.msra.mxu0 %v1083
    %1911 = vmatprep.subr.mxu0 0.0
    %1912 = vmatpush1.msra.mxu0 %v1084
    %1913 = vmatprep.subr.mxu0 0.0
    %1914 = vmatpush1.msra.mxu0 %v1085
    %1915 = vmatprep.subr.mxu0 0.0
    %1916 = vmatpush1.msra.mxu0 %v1086
    %1917 = vmatprep.subr.mxu0 0.0
    %1918 = vmatpush1.msra.mxu0 %v1087
    %1919 = vmatprep.subr.mxu0 0.0
    %1920 = vmatpush1.msra.mxu0 %v1088
    %1921 = vmatprep.subr.mxu0 0.0
    %1922 = vmatpush1.msra.mxu0 %v1247
    %1923 = vmatprep.subr.mxu0 0.0
    %1924 = vmatpush1.msra.mxu0 0.0
    %1925 = vmatprep.subr.mxu0 0.0
    %1926 = vmatpush1.msra.mxu0 0.0
    %1927 = vmatprep.subr.mxu0 0.0
    %1928 = vmatpush1.msra.mxu0 0.0
    %1929 = vmatprep.subr.mxu0 0.0
    %1930 = vmatpush1.msra.mxu0 0.0
    %1931 = vmatprep.subr.mxu0 0.0
    %1932 = vmatpush1.msra.mxu0 0.0
    %1933 = vmatprep.subr.mxu0 0.0
    %1934 = vmatpush1.msra.mxu0 0.0
    %1935 = vmatprep.subr.mxu0 0.0
    %1936 = vmatpush1.msra.mxu0 0.0
    %1937 = vmatprep.subr.mxu0 0.0
    %1938 = vmatpush1.msra.mxu0 0.0
    %1939 = vmatprep.subr.mxu0 0.0
    %1940 = vmatpush1.msra.mxu0 0.0
    %1941 = vmatprep.subr.mxu0 0.0
    %1942 = vmatpush1.msra.mxu0 0.0
    %1943 = vmatprep.subr.mxu0 0.0
    %1944 = vmatpush1.msra.mxu0 0.0
    %1945 = vmatprep.subr.mxu0 0.0
    %1946 = vmatpush1.msra.mxu0 0.0
    %1947 = vmatprep.subr.mxu0 0.0
    %1948 = vmatpush1.msra.mxu0 0.0
    %1949 = vmatprep.subr.mxu0 0.0
    %1950 = vmatpush1.msra.mxu0 0.0
    %1951 = vmatprep.subr.mxu0 0.0
    %1952 = vmatpush1.msra.mxu0 0.0
    %1953 = vmatprep.subr.mxu0 0.0
    %1954 = vmatpush1.msra.mxu0 0.0
    %1955 = vmatprep.subr.mxu0 0.0
    %1956 = vmatpush1.msra.mxu0 0.0
    %1957 = vmatprep.subr.mxu0 0.0
    %1958 = vmatpush1.msra.mxu0 0.0
    %1959 = vmatprep.subr.mxu0 0.0
    %1960 = vmatpush1.msra.mxu0 0.0
    %1961 = vmatprep.subr.mxu0 0.0
    %1962 = vmatpush1.msra.mxu0 0.0
    %1963 = vmatprep.subr.mxu0 0.0
    %1964 = vmatpush1.msra.mxu0 0.0
    %1965 = vmatprep.subr.mxu0 0.0
    %1966 = vmatpush1.msra.mxu0 0.0
    %1967 = vmatprep.subr.mxu0 0.0
    %1968 = vmatpush1.msra.mxu0 0.0
    %1969 = vmatprep.mubr.f32.mxu0 0.0
    %1970 = vmatmul.mubr.f32.gmra.mrb[0].mxu0 %v1833
    %v1971 = vpop.f32.mrb[0].mxu0
    %v1972 = vadd.f32 %v1902, %v1971
    %v1973 = vpop.f32.mrb[0].mxu0
    %1974 = vdwg.mxu0
    %s1975 = scalar_lea.vmem [#allocation7], 4
    %1976 = vst.msk [vmem:[%s1975] sm:$0x3] %vm1389, %v1972
    %s1977 = scalar_lea.vmem %s4, 72
    %v1978 = vld [vmem:[%s1977] sm:$0xff]
    %v1979 = vld [vmem:[%s1977 + $0x8] sm:$0xff]
    %v1980 = vld [vmem:[%s1977 + $0x10] sm:$0xff]
    %v1981 = vmul.f32 %v1978, %v1045
    %v1982 = vmul.f32 %v1979, %v1046
    %v1983 = vmul.f32 %v1980, %v1047
    %1984 = vmatprep.subr.mxu0 %v1982
    %1985 = vmatpush1.msra.mxu0 %v1981
    %1986 = vmatprep.subr.mxu0 0.0
    %1987 = vmatpush1.msra.mxu0 0.0
    %1988 = vmatprep.subr.mxu0 0.0
    %1989 = vmatpush1.msra.mxu0 0.0
    %1990 = vmatprep.subr.mxu0 0.0
    %1991 = vmatpush1.msra.mxu0 0.0
    %1992 = vmatprep.subr.mxu0 0.0
    %1993 = vmatpush1.msra.mxu0 0.0
    %1994 = vmatprep.subr.mxu0 0.0
    %1995 = vmatpush1.msra.mxu0 0.0
    %1996 = vmatprep.subr.mxu0 0.0
    %1997 = vmatpush1.msra.mxu0 0.0
    %1998 = vmatprep.subr.mxu0 0.0
    %1999 = vmatpush1.msra.mxu0 0.0
    %2000 = vmatprep.subr.mxu0 0.0
    %2001 = vmatpush1.msra.mxu0 0.0
    %2002 = vmatprep.subr.mxu0 0.0
    %2003 = vmatpush1.msra.mxu0 0.0
    %2004 = vmatprep.subr.mxu0 0.0
    %2005 = vmatpush1.msra.mxu0 0.0
    %2006 = vmatprep.subr.mxu0 0.0
    %2007 = vmatpush1.msra.mxu0 0.0
    %2008 = vmatprep.subr.mxu0 0.0
    %2009 = vmatpush1.msra.mxu0 0.0
    %2010 = vmatprep.subr.mxu0 0.0
    %2011 = vmatpush1.msra.mxu0 0.0
    %2012 = vmatprep.subr.mxu0 0.0
    %2013 = vmatpush1.msra.mxu0 0.0
    %2014 = vmatprep.subr.mxu0 0.0
    %2015 = vmatpush1.msra.mxu0 0.0
    %2016 = vmatprep.subr.mxu0 0.0
    %2017 = vmatpush1.msra.mxu0 0.0
    %2018 = vmatprep.subr.mxu0 0.0
    %2019 = vmatpush1.msra.mxu0 0.0
    %2020 = vmatprep.subr.mxu0 0.0
    %2021 = vmatpush1.msra.mxu0 0.0
    %2022 = vmatprep.subr.mxu0 0.0
    %2023 = vmatpush1.msra.mxu0 0.0
    %2024 = vmatprep.subr.mxu0 0.0
    %2025 = vmatpush1.msra.mxu0 0.0
    %2026 = vmatprep.subr.mxu0 0.0
    %2027 = vmatpush1.msra.mxu0 0.0
    %2028 = vmatprep.subr.mxu0 0.0
    %2029 = vmatpush1.msra.mxu0 0.0
    %2030 = vmatprep.subr.mxu0 0.0
    %2031 = vmatpush1.msra.mxu0 0.0
    %2032 = vmatprep.subr.mxu0 0.0
    %2033 = vmatpush1.msra.mxu0 0.0
    %2034 = vmatprep.subr.mxu0 0.0
    %2035 = vmatpush1.msra.mxu0 0.0
    %2036 = vmatprep.subr.mxu0 0.0
    %2037 = vmatpush1.msra.mxu0 0.0
    %2038 = vmatprep.subr.mxu0 0.0
    %2039 = vmatpush1.msra.mxu0 0.0
    %2040 = vmatprep.subr.mxu0 0.0
    %2041 = vmatpush1.msra.mxu0 0.0
    %2042 = vmatprep.subr.mxu0 0.0
    %2043 = vmatpush1.msra.mxu0 0.0
    %2044 = vmatprep.subr.mxu0 0.0
    %2045 = vmatpush1.msra.mxu0 0.0
    %2046 = vmatprep.subr.mxu0 0.0
    %2047 = vmatpush1.msra.mxu0 0.0
    %2048 = vmatprep.mubr.f32.mxu0 0.0
    %2049 = vmatmul.mubr.f32.gmra.mrb[0].mxu0 %v1098
    %v2050 = vpop.f32.mrb[0].mxu0
    %v2051 = vadd.f32 0.0, %v2050
    %v2052 = vpop.f32.mrb[0].mxu0
    %v2053 = vadd.f32 0.0, %v2052
    %2054 = vdwg.mxu0
    %2055 = vmatprep.subr.mxu0 0.0
    %2056 = vmatpush1.msra.mxu0 %v1983
    %2057 = vmatprep.subr.mxu0 0.0
    %2058 = vmatpush1.msra.mxu0 0.0
    %2059 = vmatprep.subr.mxu0 0.0
    %2060 = vmatpush1.msra.mxu0 0.0
    %2061 = vmatprep.subr.mxu0 0.0
    %2062 = vmatpush1.msra.mxu0 0.0
    %2063 = vmatprep.subr.mxu0 0.0
    %2064 = vmatpush1.msra.mxu0 0.0
    %2065 = vmatprep.subr.mxu0 0.0
    %2066 = vmatpush1.msra.mxu0 0.0
    %2067 = vmatprep.subr.mxu0 0.0
    %2068 = vmatpush1.msra.mxu0 0.0
    %2069 = vmatprep.subr.mxu0 0.0
    %2070 = vmatpush1.msra.mxu0 0.0
    %2071 = vmatprep.subr.mxu0 0.0
    %2072 = vmatpush1.msra.mxu0 0.0
    %2073 = vmatprep.subr.mxu0 0.0
    %2074 = vmatpush1.msra.mxu0 0.0
    %2075 = vmatprep.subr.mxu0 0.0
    %2076 = vmatpush1.msra.mxu0 0.0
    %2077 = vmatprep.subr.mxu0 0.0
    %2078 = vmatpush1.msra.mxu0 0.0
    %2079 = vmatprep.subr.mxu0 0.0
    %2080 = vmatpush1.msra.mxu0 0.0
    %2081 = vmatprep.subr.mxu0 0.0
    %2082 = vmatpush1.msra.mxu0 0.0
    %2083 = vmatprep.subr.mxu0 0.0
    %2084 = vmatpush1.msra.mxu0 0.0
    %2085 = vmatprep.subr.mxu0 0.0
    %2086 = vmatpush1.msra.mxu0 0.0
    %2087 = vmatprep.subr.mxu0 0.0
    %2088 = vmatpush1.msra.mxu0 0.0
    %2089 = vmatprep.subr.mxu0 0.0
    %2090 = vmatpush1.msra.mxu0 0.0
    %2091 = vmatprep.subr.mxu0 0.0
    %2092 = vmatpush1.msra.mxu0 0.0
    %2093 = vmatprep.subr.mxu0 0.0
    %2094 = vmatpush1.msra.mxu0 0.0
    %2095 = vmatprep.subr.mxu0 0.0
    %2096 = vmatpush1.msra.mxu0 0.0
    %2097 = vmatprep.subr.mxu0 0.0
    %2098 = vmatpush1.msra.mxu0 0.0
    %2099 = vmatprep.subr.mxu0 0.0
    %2100 = vmatpush1.msra.mxu0 0.0
    %2101 = vmatprep.subr.mxu0 0.0
    %2102 = vmatpush1.msra.mxu0 0.0
    %2103 = vmatprep.subr.mxu0 0.0
    %2104 = vmatpush1.msra.mxu0 0.0
    %2105 = vmatprep.subr.mxu0 0.0
    %2106 = vmatpush1.msra.mxu0 0.0
    %2107 = vmatprep.subr.mxu0 0.0
    %2108 = vmatpush1.msra.mxu0 0.0
    %2109 = vmatprep.subr.mxu0 0.0
    %2110 = vmatpush1.msra.mxu0 0.0
    %2111 = vmatprep.subr.mxu0 0.0
    %2112 = vmatpush1.msra.mxu0 0.0
    %2113 = vmatprep.subr.mxu0 0.0
    %2114 = vmatpush1.msra.mxu0 0.0
    %2115 = vmatprep.subr.mxu0 0.0
    %2116 = vmatpush1.msra.mxu0 0.0
    %2117 = vmatprep.subr.mxu0 0.0
    %2118 = vmatpush1.msra.mxu0 0.0
    %2119 = vmatprep.mubr.f32.mxu0 0.0
    %2120 = vmatmul.mubr.f32.gmra.mrb[0].mxu0 %v1098
    %v2121 = vpop.f32.mrb[0].mxu0
    %v2122 = vadd.f32 0.0, %v2121
    %v2123 = vpop.f32.mrb[0].mxu0
    %2124 = vdwg.mxu0
    %v2126 = vsel %vm1241, %v2122, 0
    %2128 = vmatprep.subr.mxu0 0.0
    %2129 = vmatpush1.msra.mxu0 %v1049
    %2130 = vmatprep.subr.mxu0 0.0
    %2131 = vmatpush1.msra.mxu0 %v1050
    %2132 = vmatprep.subr.mxu0 0.0
    %2133 = vmatpush1.msra.mxu0 %v1051
    %2134 = vmatprep.subr.mxu0 0.0
    %2135 = vmatpush1.msra.mxu0 %v1052
    %2136 = vmatprep.subr.mxu0 0.0
    %2137 = vmatpush1.msra.mxu0 %v1053
    %2138 = vmatprep.subr.mxu0 0.0
    %2139 = vmatpush1.msra.mxu0 %v1054
    %2140 = vmatprep.subr.mxu0 0.0
    %2141 = vmatpush1.msra.mxu0 %v1055
    %2142 = vmatprep.subr.mxu0 0.0
    %2143 = vmatpush1.msra.mxu0 %v1056
    %2144 = vmatprep.subr.mxu0 0.0
    %2145 = vmatpush1.msra.mxu0 %v1057
    %2146 = vmatprep.subr.mxu0 0.0
    %2147 = vmatpush1.msra.mxu0 %v1058
    %2148 = vmatprep.subr.mxu0 0.0
    %2149 = vmatpush1.msra.mxu0 %v1059
    %2150 = vmatprep.subr.mxu0 0.0
    %2151 = vmatpush1.msra.mxu0 %v1060
    %2152 = vmatprep.subr.mxu0 0.0
    %2153 = vmatpush1.msra.mxu0 %v1061
    %2154 = vmatprep.subr.mxu0 0.0
    %2155 = vmatpush1.msra.mxu0 %v1062
    %2156 = vmatprep.subr.mxu0 0.0
    %2157 = vmatpush1.msra.mxu0 %v1063
    %2158 = vmatprep.subr.mxu0 0.0
    %2159 = vmatpush1.msra.mxu0 %v1064
    %2160 = vmatprep.subr.mxu0 0.0
    %2161 = vmatpush1.msra.mxu0 %v1065
    %2162 = vmatprep.subr.mxu0 0.0
    %2163 = vmatpush1.msra.mxu0 %v1066
    %2164 = vmatprep.subr.mxu0 0.0
    %2165 = vmatpush1.msra.mxu0 %v1067
    %2166 = vmatprep.subr.mxu0 0.0
    %2167 = vmatpush1.msra.mxu0 %v1068
    %2168 = vmatprep.subr.mxu0 0.0
    %2169 = vmatpush1.msra.mxu0 %v1069
    %2170 = vmatprep.subr.mxu0 0.0
    %2171 = vmatpush1.msra.mxu0 %v1070
    %2172 = vmatprep.subr.mxu0 0.0
    %2173 = vmatpush1.msra.mxu0 %v1071
    %2174 = vmatprep.subr.mxu0 0.0
    %2175 = vmatpush1.msra.mxu0 %v1072
    %2176 = vmatprep.subr.mxu0 0.0
    %2177 = vmatpush1.msra.mxu0 %v1073
    %2178 = vmatprep.subr.mxu0 0.0
    %2179 = vmatpush1.msra.mxu0 %v1074
    %2180 = vmatprep.subr.mxu0 0.0
    %2181 = vmatpush1.msra.mxu0 %v1075
    %2182 = vmatprep.subr.mxu0 0.0
    %2183 = vmatpush1.msra.mxu0 %v1076
    %2184 = vmatprep.subr.mxu0 0.0
    %2185 = vmatpush1.msra.mxu0 %v1077
    %2186 = vmatprep.subr.mxu0 0.0
    %2187 = vmatpush1.msra.mxu0 %v1078
    %2188 = vmatprep.subr.mxu0 0.0
    %2189 = vmatpush1.msra.mxu0 %v1079
    %2190 = vmatprep.subr.mxu0 0.0
    %2191 = vmatpush1.msra.mxu0 %v1080
    %2192 = vmatprep.mubr.f32.mxu0 %v2053
    %2193 = vmatmul.mubr.f32.gmra.mrb[0].mxu0 %v2051
    %v2194 = vpop.f32.mrb[0].mxu0
    %v2195 = vadd.f32 0.0, %v2194
    %v2196 = vpop.f32.mrb[0].mxu0
    %2197 = vdwg.mxu0
    %2198 = vmatprep.subr.mxu0 0.0
    %2199 = vmatpush1.msra.mxu0 %v1081
    %2200 = vmatprep.subr.mxu0 0.0
    %2201 = vmatpush1.msra.mxu0 %v1082
    %2202 = vmatprep.subr.mxu0 0.0
    %2203 = vmatpush1.msra.mxu0 %v1083
    %2204 = vmatprep.subr.mxu0 0.0
    %2205 = vmatpush1.msra.mxu0 %v1084
    %2206 = vmatprep.subr.mxu0 0.0
    %2207 = vmatpush1.msra.mxu0 %v1085
    %2208 = vmatprep.subr.mxu0 0.0
    %2209 = vmatpush1.msra.mxu0 %v1086
    %2210 = vmatprep.subr.mxu0 0.0
    %2211 = vmatpush1.msra.mxu0 %v1087
    %2212 = vmatprep.subr.mxu0 0.0
    %2213 = vmatpush1.msra.mxu0 %v1088
    %2214 = vmatprep.subr.mxu0 0.0
    %2215 = vmatpush1.msra.mxu0 %v1247
    %2216 = vmatprep.subr.mxu0 0.0
    %2217 = vmatpush1.msra.mxu0 0.0
    %2218 = vmatprep.subr.mxu0 0.0
    %2219 = vmatpush1.msra.mxu0 0.0
    %2220 = vmatprep.subr.mxu0 0.0
    %2221 = vmatpush1.msra.mxu0 0.0
    %2222 = vmatprep.subr.mxu0 0.0
    %2223 = vmatpush1.msra.mxu0 0.0
    %2224 = vmatprep.subr.mxu0 0.0
    %2225 = vmatpush1.msra.mxu0 0.0
    %2226 = vmatprep.subr.mxu0 0.0
    %2227 = vmatpush1.msra.mxu0 0.0
    %2228 = vmatprep.subr.mxu0 0.0
    %2229 = vmatpush1.msra.mxu0 0.0
    %2230 = vmatprep.subr.mxu0 0.0
    %2231 = vmatpush1.msra.mxu0 0.0
    %2232 = vmatprep.subr.mxu0 0.0
    %2233 = vmatpush1.msra.mxu0 0.0
    %2234 = vmatprep.subr.mxu0 0.0
    %2235 = vmatpush1.msra.mxu0 0.0
    %2236 = vmatprep.subr.mxu0 0.0
    %2237 = vmatpush1.msra.mxu0 0.0
    %2238 = vmatprep.subr.mxu0 0.0
    %2239 = vmatpush1.msra.mxu0 0.0
    %2240 = vmatprep.subr.mxu0 0.0
    %2241 = vmatpush1.msra.mxu0 0.0
    %2242 = vmatprep.subr.mxu0 0.0
    %2243 = vmatpush1.msra.mxu0 0.0
    %2244 = vmatprep.subr.mxu0 0.0
    %2245 = vmatpush1.msra.mxu0 0.0
    %2246 = vmatprep.subr.mxu0 0.0
    %2247 = vmatpush1.msra.mxu0 0.0
    %2248 = vmatprep.subr.mxu0 0.0
    %2249 = vmatpush1.msra.mxu0 0.0
    %2250 = vmatprep.subr.mxu0 0.0
    %2251 = vmatpush1.msra.mxu0 0.0
    %2252 = vmatprep.subr.mxu0 0.0
    %2253 = vmatpush1.msra.mxu0 0.0
    %2254 = vmatprep.subr.mxu0 0.0
    %2255 = vmatpush1.msra.mxu0 0.0
    %2256 = vmatprep.subr.mxu0 0.0
    %2257 = vmatpush1.msra.mxu0 0.0
    %2258 = vmatprep.subr.mxu0 0.0
    %2259 = vmatpush1.msra.mxu0 0.0
    %2260 = vmatprep.subr.mxu0 0.0
    %2261 = vmatpush1.msra.mxu0 0.0
    %2262 = vmatprep.mubr.f32.mxu0 0.0
    %2263 = vmatmul.mubr.f32.gmra.mrb[0].mxu0 %v2126
    %v2264 = vpop.f32.mrb[0].mxu0
    %v2265 = vadd.f32 %v2195, %v2264
    %v2266 = vpop.f32.mrb[0].mxu0
    %2267 = vdwg.mxu0
    %s2268 = scalar_lea.vmem [#allocation7], 6
    %2269 = vst.msk [vmem:[%s2268] sm:$0x3] %vm1389, %v2265
    // Predicated region
    $region38: #{tpu_custom_call.1} parent=1 // pred_check
      _
    $region39: #{tpu_custom_call.1} parent=1 // pred_check_branch
      %2271 = sbr.rel (0) target = $region41
    $region40: #{tpu_custom_call.1} parent=1 // pred_region
      %s2273 = ssub.s32 128, 128
      %2274 = vsyncadd [#allocation4], %s2273
      %s2275 = sshll.u32 [#allocation7], 4
      %s2276 = int_to_ptr.vmem [resolvable:$true] %s2275
      %2281 = dma.vmem_to_hbm [thread:$0]  %s2276, 128, %s7, [#allocation4], 32, 32, 2
    $region41: #{tpu_custom_call.1} parent=1 // pred_fallthru
      _
    // Predicated region
    $region42: #{tpu_custom_call.1} parent=1 // pred_check
      _
    $region43: #{tpu_custom_call.1} parent=1 // pred_check_branch
      %2283 = sbr.rel (0) target = $region45
    $region44: #{tpu_custom_call.1} parent=1 // pred_region
      %2284 = dma.done [#allocation4], 128
    $region45: #{tpu_custom_call.1} parent=1 // pred_fallthru
      _
    %2285 = vsyncpa [#allocation3], 1
    %2286 = vsyncpa [#allocation6], 1
    %2287 = vsyncpa [#allocation4], 1

</llo_original>
